<compile_context>
chip_gen: v6e
topology: v6e:2x2x1
jax: 0.10.0
libtpu: 0.0.40
codegen_flags: <defaults>
</compile_context>

<pallas_src>
import functools

import jax
import jax.numpy as jnp
from jax import lax
from jax.experimental import pallas as pl
from jax.experimental.pallas import tpu as pltpu

EPS = 1e-5
MXU_DTYPE = jnp.bfloat16     # conv (MXU) input dtype; accumulation / BN / elementwise stay f32
STORE_DTYPE = jnp.bfloat16   # inter-pass activation storage dtype (HBM round trips)


# --------------------------------- in-kernel helpers ---------------------------------
def _im2col_3x3_halo(a):
    """a: (TH+2, W, C) conv input with explicit top/bottom halo rows (already zero wherever the
    3x3 / pad=1 window leaves the image).  Returns the (TH*W, 9*C) patch matrix; the W halo is
    built with two cheap lane-axis concats.  Tap order matches w.reshape(9*C_in, C_out)."""
    hh, w, c = a.shape
    th = hh - 2
    zcol = jnp.zeros((hh, 1, c), a.dtype)
    a = jnp.concatenate([zcol, a, zcol], axis=1)                       # (TH+2, W+2, C)
    taps = [a[dy:dy + th, dx:dx + w, :] for dy in range(3) for dx in range(3)]
    return jnp.concatenate(taps, axis=-1).reshape(th * w, 9 * c)      # (TH*W, 9*C)


def _stats(acc):
    """Per-tile BN partial sums (sum, sum_sq) over all pixels, per channel: (2, C) f32."""
    return jnp.concatenate(
        [jnp.sum(acc, axis=0, keepdims=True),
         jnp.sum(acc * acc, axis=0, keepdims=True)], axis=0)


# --------------------------------------- kernels --------------------------------------
def _conv1_kernel(xt_ref, xa_ref, xb_ref, w_ref, y_ref, stats_ref,
                  *, th, w_img, c_in, num_ht):
    # xt/xa/xb: (1, TH*W, Cin) f32  -- this tile / tile above / tile below (index clamped at edges)
    # w: (9*Cin, C) bf16 | y: (1, TH*W, C) bf16 | stats: (1, 2, C) f32
    t = pl.program_id(1)
    rows = th * w_img
    # Cast to bf16 *before* building any im2col temporaries (halves their footprint).
    mid = xt_ref[0].astype(MXU_DTYPE).reshape(th, w_img, c_in)
    top_raw = xa_ref[0:1, rows - w_img:rows, :]       # last image row of the tile above
    bot_raw = xb_ref[0:1, 0:w_img, :]                 # first image row of the tile below
    # conv pad=1: rows outside the image are zero (in conv-input space).
    top = jnp.where(t > 0, top_raw, 0.0).astype(MXU_DTYPE)
    bot = jnp.where(t < num_ht - 1, bot_raw, 0.0).astype(MXU_DTYPE)
    a = jnp.concatenate([top, mid, bot], axis=0)                       # (TH+2, W, Cin) bf16
    patch = _im2col_3x3_halo(a)                                        # (TH*W, 9*Cin) bf16
    acc = jnp.dot(patch, w_ref[...], preferred_element_type=jnp.float32)   # (TH*W, C) f32
    stats_ref[0] = _stats(acc)
    y_ref[0] = acc.astype(y_ref.dtype)          # stored in MXU-native (TH*W, C) shape, bf16


def _conv2_kernel(yt_ref, ya_ref, yb_ref, scale_ref, shift_ref, w_ref, y_ref, stats_ref,
                  *, th, w_img, c, num_ht):
    # bn1 applied as precomputed global (scale, shift) + relu, then conv2 + per-tile BN sums.
    t = pl.program_id(1)
    rows = th * w_img
    scale = scale_ref[...].reshape(1, 1, c)
    shift = shift_ref[...].reshape(1, 1, c)

    def act(v):   # bn1 (global scale/shift) + relu; elementwise math kept in f32 (v5e-safe)
        return jnp.maximum(v.astype(jnp.float32) * scale + shift, 0.0)

    mid = act(yt_ref[0].reshape(th, w_img, c))
    # conv2 pad rows must be zero *after* bn+relu, so zero them post-activation.
    top = jnp.where(t > 0, act(ya_ref[0:1, rows - w_img:rows, :]), 0.0)
    bot = jnp.where(t < num_ht - 1, act(yb_ref[0:1, 0:w_img, :]), 0.0)
    a = jnp.concatenate([top, mid, bot], axis=0).astype(MXU_DTYPE)     # bf16 before im2col
    patch = _im2col_3x3_halo(a)                                        # (TH*W, 9*C) bf16
    acc = jnp.dot(patch, w_ref[...], preferred_element_type=jnp.float32)
    stats_ref[0] = _stats(acc)
    y_ref[0] = acc.astype(y_ref.dtype)


def _bn_residual_kernel(y2_ref, x_ref, scale_ref, shift_ref, out_ref):
    # Pure elementwise pass: bn2 + relu, identity shortcut add, final relu.
    # All blocks are lane-dense (last dim a multiple of 128 where possible); y2 is read as bf16.
    a = jnp.maximum(y2_ref[0].astype(jnp.float32) * scale_ref[...] + shift_ref[...], 0.0)
    out_ref[0] = jnp.maximum(x_ref[0] + a, 0.0).astype(out_ref.dtype)


# ---------------------------------------- glue -----------------------------------------
def _bn_scale_shift(partial_stats, gamma, beta, count):
    """Reduce per-tile (sum, sum_sq) to global training-mode BN scale/shift (biased variance)."""
    s = jnp.sum(partial_stats, axis=0)                      # (2, C)
    mean = s[0] / count
    var = jnp.maximum(s[1] / count - mean * mean, 0.0)      # cancellation guard
    scale = gamma.astype(jnp.float32) * lax.rsqrt(var + EPS)
    shift = beta.astype(jnp.float32) - mean * scale
    return scale.reshape(1, -1), shift.reshape(1, -1)       # (1, C) each


def _choose_tiles(n, h, w_img, c, target_steps=8):
    """Pick (rows-per-step TH, lane width TL).  TL folds whole image rows so pass 3's flat view
    is lane-dense (>=128 lanes when possible); TH divides H and gives ~target_steps grid steps
    so the pipeline double-buffers and both v7x TensorCores get several steps each."""
    row_flat = w_img * c                               # one image row, flattened (..., w, c)
    rpt = 1 if row_flat >= 128 else -(-128 // row_flat)
    if h % rpt:
        rpt = 1                                        # keep the flat reshape exact (fallback)
    tl = rpt * row_flat
    th = h                                             # fallback: whole image per step
    for cand in range(rpt, h + 1, rpt):
        if h % cand:
            continue
        if n * (h // cand) <= max(target_steps, n):
            th = cand
            break
    return th, tl


# --------------------------------------- wrapper ---------------------------------------
def residual_block(x_nchw, w1, g1, b1, w2, g2, b2):
    """ResidualBlock(same_shape=True) forward.

    x_nchw: (N, Cin, H, W) f32;  w1/w2: (3, 3, Cin, C) HWIO, no bias;  g*/b*: (C,) BN affine.
    Returns (N, C, H, W) f32.
    """
    x = jnp.transpose(x_nchw, (0, 2, 3, 1)).astype(jnp.float32)        # NCHW -> NHWC
    n, h, w_img, c_in = x.shape
    c = w1.shape[3]
    if c_in != c:
        raise ValueError("ResidualBlock(same_shape=True) requires in_channel == out_channel")

    th, tl = _choose_tiles(n, h, w_img, c)
    num_ht = h // th                      # H-tiles per image
    rows = th * w_img                     # conv-output pixels per grid step (matmul M)
    tr = (th * w_img * c) // tl           # lane-dense rows per tile (pass-3 view)
    count = n * h * w_img                 # BN reduction count (over N, H, W)

    # Conv weights reshaped once -> a single MXU dot per tile with K = 9*Cin; bf16 MXU inputs.
    w1m = jnp.asarray(w1, jnp.float32).reshape(9 * c_in, c).astype(MXU_DTYPE)
    w2m = jnp.asarray(w2, jnp.float32).reshape(9 * c, c).astype(MXU_DTYPE)

    # Per-tile activation view (pure metadata reshape, no HBM copy).
    x_tiles = x.reshape(n * num_ht, rows, c)

    grid = (n, num_ht)
    tile_spec = pl.BlockSpec((1, rows, c), lambda b, t: (b * num_ht + t, 0, 0))
    # 1-row halos come from the neighbouring tiles; the index_maps clamp at the image edge and
    # the kernels zero out-of-image rows (conv pad=1), so no wrapper padding / whole-image DMA.
    above_spec = pl.BlockSpec(
        (1, rows, c), lambda b, t: (b * num_ht + jnp.maximum(t - 1, 0), 0, 0))
    below_spec = pl.BlockSpec(
        (1, rows, c), lambda b, t: (b * num_ht + jnp.minimum(t + 1, num_ht - 1), 0, 0))
    w_spec = pl.BlockSpec((9 * c, c), lambda b, t: (0, 0))      # constant index -> fetched once
    vec_spec = pl.BlockSpec((1, c), lambda b, t: (0, 0))
    stats_spec = pl.BlockSpec((1, 2, c), lambda b, t: (b * num_ht + t, 0, 0))
    # TODO(synk): on v7x at real ResNet widths, single-buffer the constant weight/scale blocks
    #             (pl.Buffered(1)) and re-derive `th` against the 64 MiB VMEM budget.
    cparams = pltpu.CompilerParams(dimension_semantics=("parallel", "parallel"),
                                   vmem_limit_bytes=32 * 1024 * 1024)

    # ---- pass 1: conv1 (bf16 im2col, one MXU dot) + per-tile BN partial sums ---------------
    kern1 = functools.partial(_conv1_kernel, th=th, w_img=w_img, c_in=c_in, num_ht=num_ht)
    y1, st1 = pl.pallas_call(
        kern1,
        grid=grid,
        in_specs=[tile_spec, above_spec, below_spec, w_spec],
        out_specs=[tile_spec, stats_spec],
        out_shape=(jax.ShapeDtypeStruct((n * num_ht, rows, c), STORE_DTYPE),
                   jax.ShapeDtypeStruct((n * num_ht, 2, c), jnp.float32)),
        compiler_params=cparams,
    )(x_tiles, x_tiles, x_tiles, w1m)
    scale1, shift1 = _bn_scale_shift(st1, g1, b1, count)

    # ---- pass 2: bn1 + relu + conv2 + per-tile BN partial sums ------------------------------
    kern2 = functools.partial(_conv2_kernel, th=th, w_img=w_img, c=c, num_ht=num_ht)
    y2, st2 = pl.pallas_call(
        kern2,
        grid=grid,
        in_specs=[tile_spec, above_spec, below_spec, vec_spec, vec_spec, w_spec],
        out_specs=[tile_spec, stats_spec],
        out_shape=(jax.ShapeDtypeStruct((n * num_ht, rows, c), STORE_DTYPE),
                   jax.ShapeDtypeStruct((n * num_ht, 2, c), jnp.float32)),
        compiler_params=cparams,
    )(y1, y1, y1, scale1, shift1, w2m)
    scale2, shift2 = _bn_scale_shift(st2, g2, b2, count)

    # ---- pass 3: bn2 + relu + residual add + relu (memory-bound; fully lane-dense blocks) ---
    y2_dense = y2.reshape(n * num_ht, tr, tl)        # free, layout-preserving reshapes
    x_dense = x.reshape(n * num_ht, tr, tl)
    scale2_t = jnp.tile(scale2.reshape(-1), tl // c).reshape(1, tl)   # channel params per lane
    shift2_t = jnp.tile(shift2.reshape(-1), tl // c).reshape(1, tl)
    dense_spec = pl.BlockSpec((1, tr, tl), lambda i: (i, 0, 0))
    lane_spec = pl.BlockSpec((1, tl), lambda i: (0, 0))
    out_dense = pl.pallas_call(
        _bn_residual_kernel,
        grid=(n * num_ht,),
        in_specs=[dense_spec, dense_spec, lane_spec, lane_spec],
        out_specs=dense_spec,
        out_shape=jax.ShapeDtypeStruct((n * num_ht, tr, tl), jnp.float32),
        compiler_params=pltpu.CompilerParams(dimension_semantics=("parallel",),
                                             vmem_limit_bytes=32 * 1024 * 1024),
    )(y2_dense, x_dense, scale2_t, shift2_t)

    out = out_dense.reshape(n, h, w_img, c)
    return jnp.transpose(out, (0, 3, 1, 2))                            # NHWC -> NCHW


# ----------------------------- pure-JAX reference (verification) -----------------------------
def _reference(x_nchw, w1, g1, b1, w2, g2, b2,
               conv_dtype=jnp.float32, store_dtype=jnp.float32):
    """Reference forward.  conv_dtype/store_dtype = MXU_DTYPE/STORE_DTYPE mirrors the kernel's
    bf16 MXU-input and bf16 intermediate-storage precision."""
    def conv3x3(a, w):
        return lax.conv_general_dilated(
            a.astype(conv_dtype), w.astype(conv_dtype),
            window_strides=(1, 1), padding=((1, 1), (1, 1)),
            dimension_numbers=("NCHW", "HWIO", "NCHW"),
            preferred_element_type=jnp.float32)

    def bn_train(a, g, b):       # batch stats over N, H, W per channel (biased variance)
        m = jnp.mean(a, axis=(0, 2, 3), keepdims=True)
        v = jnp.mean((a - m) ** 2, axis=(0, 2, 3), keepdims=True)
        return (a - m) * lax.rsqrt(v + EPS) * g.reshape(1, -1, 1, 1) + b.reshape(1, -1, 1, 1)

    y1 = conv3x3(x_nchw, w1).astype(store_dtype).astype(jnp.float32)
    a1 = jnp.maximum(bn_train(y1, g1, b1), 0.0)
    y2 = conv3x3(a1, w2).astype(store_dtype).astype(jnp.float32)
    a2 = jnp.maximum(bn_train(y2, g2, b2), 0.0)
    return jnp.maximum(x_nchw + a2, 0.0)


if __name__ == "__main__":
    N, C, H, W = 2, 4, 16, 16        # in_channel = out_channel = 4, same_shape=True
    key = jax.random.PRNGKey(0)
    k_x, k_w1, k_w2 = jax.random.split(key, 3)

    x = jax.random.normal(k_x, (N, C, H, W), jnp.float32)
    w1 = jax.random.normal(k_w1, (3, 3, C, C), jnp.float32) * 0.1    # HWIO, bias=False
    w2 = jax.random.normal(k_w2, (3, 3, C, C), jnp.float32) * 0.1
    g1 = jnp.ones((C,), jnp.float32); b1 = jnp.zeros((C,), jnp.float32)   # BN default init
    g2 = jnp.ones((C,), jnp.float32); b2 = jnp.zeros((C,), jnp.float32)

    y = jax.block_until_ready(jax.jit(residual_block)(x, w1, g1, b1, w2, g2, b2))
    assert y.shape == (N, C, H, W)

    # Check vs. a reference that mirrors the kernel's bf16 MXU inputs and bf16 intermediates
    # (remaining differences: summation order, scale/shift factorisation, rounding flips).
    y_mirror = _reference(x, w1, g1, b1, w2, g2, b2,
                          conv_dtype=MXU_DTYPE, store_dtype=STORE_DTYPE)
    err_mirror = float(jnp.max(jnp.abs(y - y_mirror)))
    assert err_mirror < 5e-2, f"bf16-mirrored reference mismatch: {err_mirror}"

    # Loose sanity check vs. exact-f32 PyTorch semantics (difference = bf16 conv inputs and
    # bf16 intermediate storage, an intentional precision trade-off).
    y_f32 = _reference(x, w1, g1, b1, w2, g2, b2)
    err_f32 = float(jnp.max(jnp.abs(y - y_f32)))
    assert err_f32 < 2e-1, f"f32 reference mismatch: {err_f32}"

    print("KERNEL_OK")
</pallas_src>

<mosaic_0001>
module attributes {stable_mosaic.version = 11 : i64} {
  func.func @_conv1_kernel(%arg0: i32, %arg1: i32, %arg2: memref<1x64x4xf32, #tpu.memory_space<vmem>>, %arg3: memref<1x64x4xf32, #tpu.memory_space<vmem>>, %arg4: memref<1x64x4xf32, #tpu.memory_space<vmem>>, %arg5: memref<36x4xbf16, #tpu.memory_space<vmem>>, %arg6: memref<1x64x4xbf16, #tpu.memory_space<vmem>>, %arg7: memref<1x2x4xf32, #tpu.memory_space<vmem>>) attributes {dimension_semantics = [#tpu.dimension_semantics<parallel>, #tpu.dimension_semantics<parallel>], iteration_bounds = array<i64: 2, 4>, scalar_prefetch = 0 : i64, scratch_operands = 0 : i64, tpu.core_type = #tpu.core_type<tc>, window_params = [{transform_indices = @transform_0, window_bounds = array<i64: 1, 64, 4>}, {transform_indices = @transform_1, window_bounds = array<i64: 1, 64, 4>}, {transform_indices = @transform_2, window_bounds = array<i64: 1, 64, 4>}, {pipeline_mode = #tpu.pipeline_mode<synchronous>, transform_indices = @transform_3, window_bounds = array<i64: 36, 4>}, {transform_indices = @transform_4, window_bounds = array<i64: 1, 64, 4>}, {transform_indices = @transform_5, window_bounds = array<i64: 1, 2, 4>}]} {
    %c0 = arith.constant 0 : index
    %c0_0 = arith.constant 0 : index
    %c0_1 = arith.constant 0 : index
    %0 = vector.load %arg2[%c0, %c0_0, %c0_1] : memref<1x64x4xf32, #tpu.memory_space<vmem>>, vector<1x64x4xf32>
    %1 = vector.shape_cast %0 : vector<1x64x4xf32> to vector<64x4xf32>
    %2 = arith.truncf %1 : vector<64x4xf32> to vector<64x4xbf16>
    %3 = vector.shape_cast %2 : vector<64x4xbf16> to vector<4x16x4xbf16>
    %c0_2 = arith.constant 0 : index
    %c48 = arith.constant 48 : index
    %c0_3 = arith.constant 0 : index
    %4 = vector.load %arg3[%c0_2, %c48, %c0_3] : memref<1x64x4xf32, #tpu.memory_space<vmem>>, vector<1x16x4xf32>
    %c0_4 = arith.constant 0 : index
    %c0_5 = arith.constant 0 : index
    %c0_6 = arith.constant 0 : index
    %5 = vector.load %arg4[%c0_4, %c0_5, %c0_6] : memref<1x64x4xf32, #tpu.memory_space<vmem>>, vector<1x16x4xf32>
    %c0_i32 = arith.constant 0 : i32
    %6 = arith.cmpi sgt, %arg1, %c0_i32 : i32
    %cst = arith.constant 0.000000e+00 : f32
    %7 = vector.broadcast %cst : f32 to vector<1x16x4xf32>
    %8 = arith.select %6, %4, %7 : vector<1x16x4xf32>
    %9 = arith.truncf %8 : vector<1x16x4xf32> to vector<1x16x4xbf16>
    %c3_i32 = arith.constant 3 : i32
    %10 = arith.cmpi slt, %arg1, %c3_i32 : i32
    %cst_7 = arith.constant 0.000000e+00 : f32
    %11 = vector.broadcast %cst_7 : f32 to vector<1x16x4xf32>
    %12 = arith.select %10, %5, %11 : vector<1x16x4xf32>
    %13 = arith.truncf %12 : vector<1x16x4xf32> to vector<1x16x4xbf16>
    %14 = tpu.concatenate %9, %3, %13 in 0 : vector<1x16x4xbf16>, vector<4x16x4xbf16>, vector<1x16x4xbf16> -> vector<6x16x4xbf16>
    %cst_8 = arith.constant 0.000000e+00 : bf16
    %15 = vector.broadcast %cst_8 : bf16 to vector<6x1x4xbf16>
    %16 = tpu.concatenate %15, %14, %15 in 1 : vector<6x1x4xbf16>, vector<6x16x4xbf16>, vector<6x1x4xbf16> -> vector<6x18x4xbf16>
    %17 = vector.extract_strided_slice %16 {offsets = [0, 0, 0], sizes = [4, 16, 4], strides = [1, 1, 1]} : vector<6x18x4xbf16> to vector<4x16x4xbf16>
    %18 = vector.extract_strided_slice %16 {offsets = [0, 1, 0], sizes = [4, 16, 4], strides = [1, 1, 1]} : vector<6x18x4xbf16> to vector<4x16x4xbf16>
    %19 = vector.extract_strided_slice %16 {offsets = [0, 2, 0], sizes = [4, 16, 4], strides = [1, 1, 1]} : vector<6x18x4xbf16> to vector<4x16x4xbf16>
    %20 = vector.extract_strided_slice %16 {offsets = [1, 0, 0], sizes = [4, 16, 4], strides = [1, 1, 1]} : vector<6x18x4xbf16> to vector<4x16x4xbf16>
    %21 = vector.extract_strided_slice %16 {offsets = [1, 1, 0], sizes = [4, 16, 4], strides = [1, 1, 1]} : vector<6x18x4xbf16> to vector<4x16x4xbf16>
    %22 = vector.extract_strided_slice %16 {offsets = [1, 2, 0], sizes = [4, 16, 4], strides = [1, 1, 1]} : vector<6x18x4xbf16> to vector<4x16x4xbf16>
    %23 = vector.extract_strided_slice %16 {offsets = [2, 0, 0], sizes = [4, 16, 4], strides = [1, 1, 1]} : vector<6x18x4xbf16> to vector<4x16x4xbf16>
    %24 = vector.extract_strided_slice %16 {offsets = [2, 1, 0], sizes = [4, 16, 4], strides = [1, 1, 1]} : vector<6x18x4xbf16> to vector<4x16x4xbf16>
    %25 = vector.extract_strided_slice %16 {offsets = [2, 2, 0], sizes = [4, 16, 4], strides = [1, 1, 1]} : vector<6x18x4xbf16> to vector<4x16x4xbf16>
    %26 = tpu.concatenate %17, %18, %19, %20, %21, %22, %23, %24, %25 in 2 : vector<4x16x4xbf16>, vector<4x16x4xbf16>, vector<4x16x4xbf16>, vector<4x16x4xbf16>, vector<4x16x4xbf16>, vector<4x16x4xbf16>, vector<4x16x4xbf16>, vector<4x16x4xbf16>, vector<4x16x4xbf16> -> vector<4x16x36xbf16>
    %27 = vector.shape_cast %26 : vector<4x16x36xbf16> to vector<64x36xbf16>
    %c0_9 = arith.constant 0 : index
    %c0_10 = arith.constant 0 : index
    %28 = vector.load %arg5[%c0_9, %c0_10] : memref<36x4xbf16, #tpu.memory_space<vmem>>, vector<36x4xbf16>
    %cst_11 = arith.constant dense<0.000000e+00> : vector<64x4xf32>
    %29 = tpu.matmul %27, %28, %cst_11 {dimension_numbers = #tpu.dot_dimension_numbers<[1], [0], [0], [1], [0, 0, 1, 1], [], []>} : vector<64x36xbf16>, vector<36x4xbf16>, vector<64x4xf32> -> vector<64x4xf32>
    %cst_12 = arith.constant dense<0.000000e+00> : vector<4xf32>
    %30 = vector.multi_reduction <add>, %29, %cst_12 [0] : vector<64x4xf32> to vector<4xf32>
    %31 = vector.shape_cast %30 : vector<4xf32> to vector<1x4xf32>
    %32 = arith.mulf %29, %29 : vector<64x4xf32>
    %cst_13 = arith.constant dense<0.000000e+00> : vector<4xf32>
    %33 = vector.multi_reduction <add>, %32, %cst_13 [0] : vector<64x4xf32> to vector<4xf32>
    %34 = vector.shape_cast %33 : vector<4xf32> to vector<1x4xf32>
    %35 = tpu.concatenate %31, %34 in 0 : vector<1x4xf32>, vector<1x4xf32> -> vector<2x4xf32>
    %c0_14 = arith.constant 0 : index
    %c0_15 = arith.constant 0 : index
    %c0_16 = arith.constant 0 : index
    %36 = vector.load %arg7[%c0_14, %c0_15, %c0_16] : memref<1x2x4xf32, #tpu.memory_space<vmem>>, vector<1x2x4xf32>
    %37 = vector.shape_cast %36 : vector<1x2x4xf32> to vector<2x4xf32>
    %38 = vector.shape_cast %35 : vector<2x4xf32> to vector<1x2x4xf32>
    tpu.vector_store %arg7[%c0_14, %c0_15, %c0_16], %38 {strides = array<i32>} : memref<1x2x4xf32, #tpu.memory_space<vmem>>, vector<1x2x4xf32>,
    %39 = arith.truncf %29 : vector<64x4xf32> to vector<64x4xbf16>
    %c0_17 = arith.constant 0 : index
    %c0_18 = arith.constant 0 : index
    %c0_19 = arith.constant 0 : index
    %40 = vector.load %arg6[%c0_17, %c0_18, %c0_19] : memref<1x64x4xbf16, #tpu.memory_space<vmem>>, vector<1x64x4xbf16>
    %41 = vector.shape_cast %40 : vector<1x64x4xbf16> to vector<64x4xbf16>
    %42 = vector.shape_cast %39 : vector<64x4xbf16> to vector<1x64x4xbf16>
    tpu.vector_store %arg6[%c0_17, %c0_18, %c0_19], %42 {strides = array<i32>} : memref<1x64x4xbf16, #tpu.memory_space<vmem>>, vector<1x64x4xbf16>,
    return
  }
  func.func @transform_0(%arg0: i32, %arg1: i32) -> (i32, i32, i32) {
    %c4_i32 = arith.constant 4 : i32
    %0 = arith.muli %arg0, %c4_i32 : i32
    %1 = arith.addi %0, %arg1 : i32
    %c0_i32 = arith.constant 0 : i32
    %c0_i32_0 = arith.constant 0 : i32
    %c0_i32_1 = arith.constant 0 : i32
    return %1, %c0_i32, %c0_i32_0 : i32, i32, i32
  }
  func.func @transform_1(%arg0: i32, %arg1: i32) -> (i32, i32, i32) {
    %c4_i32 = arith.constant 4 : i32
    %0 = arith.muli %arg0, %c4_i32 : i32
    %c1_i32 = arith.constant 1 : i32
    %1 = arith.subi %arg1, %c1_i32 : i32
    %c0_i32 = arith.constant 0 : i32
    %2 = arith.maxsi %1, %c0_i32 : i32
    %3 = arith.addi %0, %2 : i32
    %c0_i32_0 = arith.constant 0 : i32
    %c0_i32_1 = arith.constant 0 : i32
    %c0_i32_2 = arith.constant 0 : i32
    return %3, %c0_i32_0, %c0_i32_1 : i32, i32, i32
  }
  func.func @transform_2(%arg0: i32, %arg1: i32) -> (i32, i32, i32) {
    %c4_i32 = arith.constant 4 : i32
    %0 = arith.muli %arg0, %c4_i32 : i32
    %c1_i32 = arith.constant 1 : i32
    %1 = arith.addi %arg1, %c1_i32 : i32
    %c3_i32 = arith.constant 3 : i32
    %2 = arith.minsi %1, %c3_i32 : i32
    %3 = arith.addi %0, %2 : i32
    %c0_i32 = arith.constant 0 : i32
    %c0_i32_0 = arith.constant 0 : i32
    %c0_i32_1 = arith.constant 0 : i32
    return %3, %c0_i32, %c0_i32_0 : i32, i32, i32
  }
  func.func @transform_3(%arg0: i32, %arg1: i32) -> (i32, i32) {
    %c0_i32 = arith.constant 0 : i32
    %c0_i32_0 = arith.constant 0 : i32
    %c0_i32_1 = arith.constant 0 : i32
    return %c0_i32, %c0_i32_0 : i32, i32
  }
  func.func @transform_4(%arg0: i32, %arg1: i32) -> (i32, i32, i32) {
    %c4_i32 = arith.constant 4 : i32
    %0 = arith.muli %arg0, %c4_i32 : i32
    %1 = arith.addi %0, %arg1 : i32
    %c0_i32 = arith.constant 0 : i32
    %c0_i32_0 = arith.constant 0 : i32
    %c0_i32_1 = arith.constant 0 : i32
    return %1, %c0_i32, %c0_i32_0 : i32, i32, i32
  }
  func.func @transform_5(%arg0: i32, %arg1: i32) -> (i32, i32, i32) {
    %c4_i32 = arith.constant 4 : i32
    %0 = arith.muli %arg0, %c4_i32 : i32
    %1 = arith.addi %0, %arg1 : i32
    %c0_i32 = arith.constant 0 : i32
    %c0_i32_0 = arith.constant 0 : i32
    %c0_i32_1 = arith.constant 0 : i32
    return %1, %c0_i32, %c0_i32_0 : i32, i32, i32
  }
}

module attributes {stable_mosaic.version = 11 : i64} {
  func.func @_conv2_kernel(%arg0: i32, %arg1: i32, %arg2: memref<1x64x4xbf16, #tpu.memory_space<vmem>>, %arg3: memref<1x64x4xbf16, #tpu.memory_space<vmem>>, %arg4: memref<1x64x4xbf16, #tpu.memory_space<vmem>>, %arg5: memref<1x4xf32, #tpu.memory_space<vmem>>, %arg6: memref<1x4xf32, #tpu.memory_space<vmem>>, %arg7: memref<36x4xbf16, #tpu.memory_space<vmem>>, %arg8: memref<1x64x4xbf16, #tpu.memory_space<vmem>>, %arg9: memref<1x2x4xf32, #tpu.memory_space<vmem>>) attributes {dimension_semantics = [#tpu.dimension_semantics<parallel>, #tpu.dimension_semantics<parallel>], iteration_bounds = array<i64: 2, 4>, scalar_prefetch = 0 : i64, scratch_operands = 0 : i64, tpu.core_type = #tpu.core_type<tc>, window_params = [{transform_indices = @transform_0, window_bounds = array<i64: 1, 64, 4>}, {transform_indices = @transform_1, window_bounds = array<i64: 1, 64, 4>}, {transform_indices = @transform_2, window_bounds = array<i64: 1, 64, 4>}, {pipeline_mode = #tpu.pipeline_mode<synchronous>, transform_indices = @transform_3, window_bounds = array<i64: 1, 4>}, {pipeline_mode = #tpu.pipeline_mode<synchronous>, transform_indices = @transform_4, window_bounds = array<i64: 1, 4>}, {pipeline_mode = #tpu.pipeline_mode<synchronous>, transform_indices = @transform_5, window_bounds = array<i64: 36, 4>}, {transform_indices = @transform_6, window_bounds = array<i64: 1, 64, 4>}, {transform_indices = @transform_7, window_bounds = array<i64: 1, 2, 4>}]} {
    %c0 = arith.constant 0 : index
    %c0_0 = arith.constant 0 : index
    %0 = vector.load %arg5[%c0, %c0_0] : memref<1x4xf32, #tpu.memory_space<vmem>>, vector<1x4xf32>
    %1 = vector.shape_cast %0 : vector<1x4xf32> to vector<1x1x4xf32>
    %c0_1 = arith.constant 0 : index
    %c0_2 = arith.constant 0 : index
    %2 = vector.load %arg6[%c0_1, %c0_2] : memref<1x4xf32, #tpu.memory_space<vmem>>, vector<1x4xf32>
    %3 = vector.shape_cast %2 : vector<1x4xf32> to vector<1x1x4xf32>
    %c0_3 = arith.constant 0 : index
    %c0_4 = arith.constant 0 : index
    %c0_5 = arith.constant 0 : index
    %4 = vector.load %arg2[%c0_3, %c0_4, %c0_5] : memref<1x64x4xbf16, #tpu.memory_space<vmem>>, vector<1x64x4xbf16>
    %5 = vector.shape_cast %4 : vector<1x64x4xbf16> to vector<64x4xbf16>
    %6 = vector.shape_cast %5 : vector<64x4xbf16> to vector<4x16x4xbf16>
    %7 = arith.extf %6 : vector<4x16x4xbf16> to vector<4x16x4xf32>
    %8 = vector.broadcast %1 : vector<1x1x4xf32> to vector<4x16x4xf32>
    %9 = arith.mulf %7, %8 : vector<4x16x4xf32>
    %10 = vector.broadcast %3 : vector<1x1x4xf32> to vector<4x16x4xf32>
    %11 = arith.addf %9, %10 : vector<4x16x4xf32>
    %cst = arith.constant 0.000000e+00 : f32
    %12 = vector.broadcast %cst : f32 to vector<4x16x4xf32>
    %13 = arith.maximumf %11, %12 : vector<4x16x4xf32>
    %c0_i32 = arith.constant 0 : i32
    %14 = arith.cmpi sgt, %arg1, %c0_i32 : i32
    %c0_6 = arith.constant 0 : index
    %c48 = arith.constant 48 : index
    %c0_7 = arith.constant 0 : index
    %15 = vector.load %arg3[%c0_6, %c48, %c0_7] : memref<1x64x4xbf16, #tpu.memory_space<vmem>>, vector<1x16x4xbf16>
    %16 = arith.extf %15 : vector<1x16x4xbf16> to vector<1x16x4xf32>
    %17 = vector.broadcast %1 : vector<1x1x4xf32> to vector<1x16x4xf32>
    %18 = arith.mulf %16, %17 : vector<1x16x4xf32>
    %19 = vector.broadcast %3 : vector<1x1x4xf32> to vector<1x16x4xf32>
    %20 = arith.addf %18, %19 : vector<1x16x4xf32>
    %cst_8 = arith.constant 0.000000e+00 : f32
    %21 = vector.broadcast %cst_8 : f32 to vector<1x16x4xf32>
    %22 = arith.maximumf %20, %21 : vector<1x16x4xf32>
    %cst_9 = arith.constant 0.000000e+00 : f32
    %23 = vector.broadcast %cst_9 : f32 to vector<1x16x4xf32>
    %24 = arith.select %14, %22, %23 : vector<1x16x4xf32>
    %c3_i32 = arith.constant 3 : i32
    %25 = arith.cmpi slt, %arg1, %c3_i32 : i32
    %c0_10 = arith.constant 0 : index
    %c0_11 = arith.constant 0 : index
    %c0_12 = arith.constant 0 : index
    %26 = vector.load %arg4[%c0_10, %c0_11, %c0_12] : memref<1x64x4xbf16, #tpu.memory_space<vmem>>, vector<1x16x4xbf16>
    %27 = arith.extf %26 : vector<1x16x4xbf16> to vector<1x16x4xf32>
    %28 = vector.broadcast %1 : vector<1x1x4xf32> to vector<1x16x4xf32>
    %29 = arith.mulf %27, %28 : vector<1x16x4xf32>
    %30 = vector.broadcast %3 : vector<1x1x4xf32> to vector<1x16x4xf32>
    %31 = arith.addf %29, %30 : vector<1x16x4xf32>
    %cst_13 = arith.constant 0.000000e+00 : f32
    %32 = vector.broadcast %cst_13 : f32 to vector<1x16x4xf32>
    %33 = arith.maximumf %31, %32 : vector<1x16x4xf32>
    %cst_14 = arith.constant 0.000000e+00 : f32
    %34 = vector.broadcast %cst_14 : f32 to vector<1x16x4xf32>
    %35 = arith.select %25, %33, %34 : vector<1x16x4xf32>
    %36 = tpu.concatenate %24, %13, %35 in 0 : vector<1x16x4xf32>, vector<4x16x4xf32>, vector<1x16x4xf32> -> vector<6x16x4xf32>
    %37 = arith.truncf %36 : vector<6x16x4xf32> to vector<6x16x4xbf16>
    %cst_15 = arith.constant 0.000000e+00 : bf16
    %38 = vector.broadcast %cst_15 : bf16 to vector<6x1x4xbf16>
    %39 = tpu.concatenate %38, %37, %38 in 1 : vector<6x1x4xbf16>, vector<6x16x4xbf16>, vector<6x1x4xbf16> -> vector<6x18x4xbf16>
    %40 = vector.extract_strided_slice %39 {offsets = [0, 0, 0], sizes = [4, 16, 4], strides = [1, 1, 1]} : vector<6x18x4xbf16> to vector<4x16x4xbf16>
    %41 = vector.extract_strided_slice %39 {offsets = [0, 1, 0], sizes = [4, 16, 4], strides = [1, 1, 1]} : vector<6x18x4xbf16> to vector<4x16x4xbf16>
    %42 = vector.extract_strided_slice %39 {offsets = [0, 2, 0], sizes = [4, 16, 4], strides = [1, 1, 1]} : vector<6x18x4xbf16> to vector<4x16x4xbf16>
    %43 = vector.extract_strided_slice %39 {offsets = [1, 0, 0], sizes = [4, 16, 4], strides = [1, 1, 1]} : vector<6x18x4xbf16> to vector<4x16x4xbf16>
    %44 = vector.extract_strided_slice %39 {offsets = [1, 1, 0], sizes = [4, 16, 4], strides = [1, 1, 1]} : vector<6x18x4xbf16> to vector<4x16x4xbf16>
    %45 = vector.extract_strided_slice %39 {offsets = [1, 2, 0], sizes = [4, 16, 4], strides = [1, 1, 1]} : vector<6x18x4xbf16> to vector<4x16x4xbf16>
    %46 = vector.extract_strided_slice %39 {offsets = [2, 0, 0], sizes = [4, 16, 4], strides = [1, 1, 1]} : vector<6x18x4xbf16> to vector<4x16x4xbf16>
    %47 = vector.extract_strided_slice %39 {offsets = [2, 1, 0], sizes = [4, 16, 4], strides = [1, 1, 1]} : vector<6x18x4xbf16> to vector<4x16x4xbf16>
    %48 = vector.extract_strided_slice %39 {offsets = [2, 2, 0], sizes = [4, 16, 4], strides = [1, 1, 1]} : vector<6x18x4xbf16> to vector<4x16x4xbf16>
    %49 = tpu.concatenate %40, %41, %42, %43, %44, %45, %46, %47, %48 in 2 : vector<4x16x4xbf16>, vector<4x16x4xbf16>, vector<4x16x4xbf16>, vector<4x16x4xbf16>, vector<4x16x4xbf16>, vector<4x16x4xbf16>, vector<4x16x4xbf16>, vector<4x16x4xbf16>, vector<4x16x4xbf16> -> vector<4x16x36xbf16>
    %50 = vector.shape_cast %49 : vector<4x16x36xbf16> to vector<64x36xbf16>
    %c0_16 = arith.constant 0 : index
    %c0_17 = arith.constant 0 : index
    %51 = vector.load %arg7[%c0_16, %c0_17] : memref<36x4xbf16, #tpu.memory_space<vmem>>, vector<36x4xbf16>
    %cst_18 = arith.constant dense<0.000000e+00> : vector<64x4xf32>
    %52 = tpu.matmul %50, %51, %cst_18 {dimension_numbers = #tpu.dot_dimension_numbers<[1], [0], [0], [1], [0, 0, 1, 1], [], []>} : vector<64x36xbf16>, vector<36x4xbf16>, vector<64x4xf32> -> vector<64x4xf32>
    %cst_19 = arith.constant dense<0.000000e+00> : vector<4xf32>
    %53 = vector.multi_reduction <add>, %52, %cst_19 [0] : vector<64x4xf32> to vector<4xf32>
    %54 = vector.shape_cast %53 : vector<4xf32> to vector<1x4xf32>
    %55 = arith.mulf %52, %52 : vector<64x4xf32>
    %cst_20 = arith.constant dense<0.000000e+00> : vector<4xf32>
    %56 = vector.multi_reduction <add>, %55, %cst_20 [0] : vector<64x4xf32> to vector<4xf32>
    %57 = vector.shape_cast %56 : vector<4xf32> to vector<1x4xf32>
    %58 = tpu.concatenate %54, %57 in 0 : vector<1x4xf32>, vector<1x4xf32> -> vector<2x4xf32>
    %c0_21 = arith.constant 0 : index
    %c0_22 = arith.constant 0 : index
    %c0_23 = arith.constant 0 : index
    %59 = vector.load %arg9[%c0_21, %c0_22, %c0_23] : memref<1x2x4xf32, #tpu.memory_space<vmem>>, vector<1x2x4xf32>
    %60 = vector.shape_cast %59 : vector<1x2x4xf32> to vector<2x4xf32>
    %61 = vector.shape_cast %58 : vector<2x4xf32> to vector<1x2x4xf32>
    tpu.vector_store %arg9[%c0_21, %c0_22, %c0_23], %61 {strides = array<i32>} : memref<1x2x4xf32, #tpu.memory_space<vmem>>, vector<1x2x4xf32>,
    %62 = arith.truncf %52 : vector<64x4xf32> to vector<64x4xbf16>
    %c0_24 = arith.constant 0 : index
    %c0_25 = arith.constant 0 : index
    %c0_26 = arith.constant 0 : index
    %63 = vector.load %arg8[%c0_24, %c0_25, %c0_26] : memref<1x64x4xbf16, #tpu.memory_space<vmem>>, vector<1x64x4xbf16>
    %64 = vector.shape_cast %63 : vector<1x64x4xbf16> to vector<64x4xbf16>
    %65 = vector.shape_cast %62 : vector<64x4xbf16> to vector<1x64x4xbf16>
    tpu.vector_store %arg8[%c0_24, %c0_25, %c0_26], %65 {strides = array<i32>} : memref<1x64x4xbf16, #tpu.memory_space<vmem>>, vector<1x64x4xbf16>,
    return
  }
  func.func @transform_0(%arg0: i32, %arg1: i32) -> (i32, i32, i32) {
    %c4_i32 = arith.constant 4 : i32
    %0 = arith.muli %arg0, %c4_i32 : i32
    %1 = arith.addi %0, %arg1 : i32
    %c0_i32 = arith.constant 0 : i32
    %c0_i32_0 = arith.constant 0 : i32
    %c0_i32_1 = arith.constant 0 : i32
    return %1, %c0_i32, %c0_i32_0 : i32, i32, i32
  }
  func.func @transform_1(%arg0: i32, %arg1: i32) -> (i32, i32, i32) {
    %c4_i32 = arith.constant 4 : i32
    %0 = arith.muli %arg0, %c4_i32 : i32
    %c1_i32 = arith.constant 1 : i32
    %1 = arith.subi %arg1, %c1_i32 : i32
    %c0_i32 = arith.constant 0 : i32
    %2 = arith.maxsi %1, %c0_i32 : i32
    %3 = arith.addi %0, %2 : i32
    %c0_i32_0 = arith.constant 0 : i32
    %c0_i32_1 = arith.constant 0 : i32
    %c0_i32_2 = arith.constant 0 : i32
    return %3, %c0_i32_0, %c0_i32_1 : i32, i32, i32
  }
  func.func @transform_2(%arg0: i32, %arg1: i32) -> (i32, i32, i32) {
    %c4_i32 = arith.constant 4 : i32
    %0 = arith.muli %arg0, %c4_i32 : i32
    %c1_i32 = arith.constant 1 : i32
    %1 = arith.addi %arg1, %c1_i32 : i32
    %c3_i32 = arith.constant 3 : i32
    %2 = arith.minsi %1, %c3_i32 : i32
    %3 = arith.addi %0, %2 : i32
    %c0_i32 = arith.constant 0 : i32
    %c0_i32_0 = arith.constant 0 : i32
    %c0_i32_1 = arith.constant 0 : i32
    return %3, %c0_i32, %c0_i32_0 : i32, i32, i32
  }
  func.func @transform_3(%arg0: i32, %arg1: i32) -> (i32, i32) {
    %c0_i32 = arith.constant 0 : i32
    %c0_i32_0 = arith.constant 0 : i32
    %c0_i32_1 = arith.constant 0 : i32
    return %c0_i32, %c0_i32_0 : i32, i32
  }
  func.func @transform_4(%arg0: i32, %arg1: i32) -> (i32, i32) {
    %c0_i32 = arith.constant 0 : i32
    %c0_i32_0 = arith.constant 0 : i32
    %c0_i32_1 = arith.constant 0 : i32
    return %c0_i32, %c0_i32_0 : i32, i32
  }
  func.func @transform_5(%arg0: i32, %arg1: i32) -> (i32, i32) {
    %c0_i32 = arith.constant 0 : i32
    %c0_i32_0 = arith.constant 0 : i32
    %c0_i32_1 = arith.constant 0 : i32
    return %c0_i32, %c0_i32_0 : i32, i32
  }
  func.func @transform_6(%arg0: i32, %arg1: i32) -> (i32, i32, i32) {
    %c4_i32 = arith.constant 4 : i32
    %0 = arith.muli %arg0, %c4_i32 : i32
    %1 = arith.addi %0, %arg1 : i32
    %c0_i32 = arith.constant 0 : i32
    %c0_i32_0 = arith.constant 0 : i32
    %c0_i32_1 = arith.constant 0 : i32
    return %1, %c0_i32, %c0_i32_0 : i32, i32, i32
  }
  func.func @transform_7(%arg0: i32, %arg1: i32) -> (i32, i32, i32) {
    %c4_i32 = arith.constant 4 : i32
    %0 = arith.muli %arg0, %c4_i32 : i32
    %1 = arith.addi %0, %arg1 : i32
    %c0_i32 = arith.constant 0 : i32
    %c0_i32_0 = arith.constant 0 : i32
    %c0_i32_1 = arith.constant 0 : i32
    return %1, %c0_i32, %c0_i32_0 : i32, i32, i32
  }
}

module attributes {stable_mosaic.version = 11 : i64} {
  func.func @_bn_residual_kernel(%arg0: i32, %arg1: memref<1x2x128xbf16, #tpu.memory_space<vmem>>, %arg2: memref<1x2x128xf32, #tpu.memory_space<vmem>>, %arg3: memref<1x128xf32, #tpu.memory_space<vmem>>, %arg4: memref<1x128xf32, #tpu.memory_space<vmem>>, %arg5: memref<1x2x128xf32, #tpu.memory_space<vmem>>) attributes {dimension_semantics = [#tpu.dimension_semantics<parallel>], iteration_bounds = array<i64: 8>, scalar_prefetch = 0 : i64, scratch_operands = 0 : i64, tpu.core_type = #tpu.core_type<tc>, window_params = [{transform_indices = @transform_0, window_bounds = array<i64: 1, 2, 128>}, {transform_indices = @transform_1, window_bounds = array<i64: 1, 2, 128>}, {pipeline_mode = #tpu.pipeline_mode<synchronous>, transform_indices = @transform_2, window_bounds = array<i64: 1, 128>}, {pipeline_mode = #tpu.pipeline_mode<synchronous>, transform_indices = @transform_3, window_bounds = array<i64: 1, 128>}, {transform_indices = @transform_4, window_bounds = array<i64: 1, 2, 128>}]} {
    %c0 = arith.constant 0 : index
    %c0_0 = arith.constant 0 : index
    %c0_1 = arith.constant 0 : index
    %0 = vector.load %arg1[%c0, %c0_0, %c0_1] : memref<1x2x128xbf16, #tpu.memory_space<vmem>>, vector<1x2x128xbf16>
    %1 = vector.shape_cast %0 : vector<1x2x128xbf16> to vector<2x128xbf16>
    %2 = arith.extf %1 : vector<2x128xbf16> to vector<2x128xf32>
    %c0_2 = arith.constant 0 : index
    %c0_3 = arith.constant 0 : index
    %3 = vector.load %arg3[%c0_2, %c0_3] : memref<1x128xf32, #tpu.memory_space<vmem>>, vector<1x128xf32>
    %4 = vector.broadcast %3 : vector<1x128xf32> to vector<2x128xf32>
    %5 = arith.mulf %2, %4 : vector<2x128xf32>
    %c0_4 = arith.constant 0 : index
    %c0_5 = arith.constant 0 : index
    %6 = vector.load %arg4[%c0_4, %c0_5] : memref<1x128xf32, #tpu.memory_space<vmem>>, vector<1x128xf32>
    %7 = vector.broadcast %6 : vector<1x128xf32> to vector<2x128xf32>
    %8 = arith.addf %5, %7 : vector<2x128xf32>
    %cst = arith.constant 0.000000e+00 : f32
    %9 = vector.broadcast %cst : f32 to vector<2x128xf32>
    %10 = arith.maximumf %8, %9 : vector<2x128xf32>
    %c0_6 = arith.constant 0 : index
    %c0_7 = arith.constant 0 : index
    %c0_8 = arith.constant 0 : index
    %11 = vector.load %arg2[%c0_6, %c0_7, %c0_8] : memref<1x2x128xf32, #tpu.memory_space<vmem>>, vector<1x2x128xf32>
    %12 = vector.shape_cast %11 : vector<1x2x128xf32> to vector<2x128xf32>
    %13 = arith.addf %12, %10 : vector<2x128xf32>
    %cst_9 = arith.constant 0.000000e+00 : f32
    %14 = vector.broadcast %cst_9 : f32 to vector<2x128xf32>
    %15 = arith.maximumf %13, %14 : vector<2x128xf32>
    %c0_10 = arith.constant 0 : index
    %c0_11 = arith.constant 0 : index
    %c0_12 = arith.constant 0 : index
    %16 = vector.load %arg5[%c0_10, %c0_11, %c0_12] : memref<1x2x128xf32, #tpu.memory_space<vmem>>, vector<1x2x128xf32>
    %17 = vector.shape_cast %16 : vector<1x2x128xf32> to vector<2x128xf32>
    %18 = vector.shape_cast %15 : vector<2x128xf32> to vector<1x2x128xf32>
    tpu.vector_store %arg5[%c0_10, %c0_11, %c0_12], %18 {strides = array<i32>} : memref<1x2x128xf32, #tpu.memory_space<vmem>>, vector<1x2x128xf32>,
    return
  }
  func.func @transform_0(%arg0: i32) -> (i32, i32, i32) {
    %c0_i32 = arith.constant 0 : i32
    %c0_i32_0 = arith.constant 0 : i32
    %c0_i32_1 = arith.constant 0 : i32
    return %arg0, %c0_i32, %c0_i32_0 : i32, i32, i32
  }
  func.func @transform_1(%arg0: i32) -> (i32, i32, i32) {
    %c0_i32 = arith.constant 0 : i32
    %c0_i32_0 = arith.constant 0 : i32
    %c0_i32_1 = arith.constant 0 : i32
    return %arg0, %c0_i32, %c0_i32_0 : i32, i32, i32
  }
  func.func @transform_2(%arg0: i32) -> (i32, i32) {
    %c0_i32 = arith.constant 0 : i32
    %c0_i32_0 = arith.constant 0 : i32
    %c0_i32_1 = arith.constant 0 : i32
    return %c0_i32, %c0_i32_0 : i32, i32
  }
  func.func @transform_3(%arg0: i32) -> (i32, i32) {
    %c0_i32 = arith.constant 0 : i32
    %c0_i32_0 = arith.constant 0 : i32
    %c0_i32_1 = arith.constant 0 : i32
    return %c0_i32, %c0_i32_0 : i32, i32
  }
  func.func @transform_4(%arg0: i32) -> (i32, i32, i32) {
    %c0_i32 = arith.constant 0 : i32
    %c0_i32_0 = arith.constant 0 : i32
    %c0_i32_1 = arith.constant 0 : i32
    return %arg0, %c0_i32, %c0_i32_0 : i32, i32, i32
  }
}

</mosaic_0001>

<llo_original>
// kernel: residual_block.3
$region0: #{residual_block.3}
  #allocation0 [shape = 'u32[]', space=smem, size = 0x4, offset = 0x4, fixed_abs, tag = 'smem constant byte address 0x4 - core index']
  #allocation1 [shape = 'u32[144,128]{1,0:T(1,128)}', space=vmem, size = 0x12000, scoped, tag = 'internal scratch']
  %s0 = inlined_call_operand.vmem [shape: f32[8,64,4], index: 0, kind: input, shape index: {}, may-alias: {0,1,2}]
  %s1 = inlined_call_operand.vmem [shape: f32[8,64,4], index: 1, kind: input, shape index: {}, may-alias: {0,1,2}]
  %s2 = inlined_call_operand.vmem [shape: f32[8,64,4], index: 2, kind: input, shape index: {}, may-alias: {0,1,2}]
  %s3 = inlined_call_operand.vmem [shape: bf16[36,4], index: 3, kind: input, shape index: {}]
  %s4 = inlined_call_operand.vmem [shape: bf16[8,64,4], index: 4, kind: output, shape index: {0}]
  %s5 = inlined_call_operand.vmem [shape: f32[8,2,4], index: 5, kind: output, shape index: {1}]
  %6 = xla_tuple %s4, %s5
  %s7 = sld [smem:[#allocation0]]
  $region57: #{residual_block.3} parent=0
    _
  %s9 = ssub.s32 1, %s7
  %s10 = scalar_select 0, %s9, %s7
  loop: start=0, step=1, limit=10
  $region2: #{residual_block.3} parent=0 // loop_pre_header
    _
  $region3: #{residual_block.3} parent=0 // loop_header
    %s12 = sphi 0, %s16
    %p13 = scmp.ge.s32.totalorder %s12, 10
    %s19 = sphi 0, %s31
    %s20 = sphi 0, %s27
    %s21 = sphi 0, %s19
    %s22 = sphi 0, %s20
    %s23 = sphi 0, %s21
    %s24 = sphi 0, %s22
    %s38 = sphi 0, %s40
    %s41 = sphi 0, %s38
    %s42 = sphi 0, %s41
    %s58 = sphi 0, %s42
    %s74 = sphi 0, %s76
    %s77 = sphi 0, %s74
    %s78 = sphi 0, %s77
    %s94 = sphi 0, %s78
    %s110 = sphi 0, %s112
    %s113 = sphi 0, %s110
    %s114 = sphi 0, %s113
    %s130 = sphi 0, %s114
    %s134 = sphi 0, %s134
    %s136 = sphi 0, %s134
    %s137 = sphi 0, %s136
    %s151 = sphi 0, %s137
    %s161 = sphi 0, %s163
    %s164 = sphi 0, %s161
    %s165 = sphi 0, %s164
    %s181 = sphi 0, %s165
    %s191 = sphi 0, %s193
    %s194 = sphi 0, %s191
    %s195 = sphi 0, %s194
    %s211 = sphi 0, %s195
  $region4: #{residual_block.3} parent=0 // loop_header_branch
    %15 = sbr.rel (%p13) target = $region8
  $region5: #{residual_block.3} parent=0 // loop_body
    %s17 = ssub.s32 %s12, 1
    %s18 = ssub.s32 %s12, 2
    %s25 = sadd.s32 1, %s20
    %p26 = scmp.ge.s32.totalorder %s25, 4
    %s27 = scalar_select %p26, 0, %s25
    %s28 = sadd.s32 1, %s19
    %s29 = scalar_select %p26, %s28, %s19
    %p30 = scmp.ge.s32.totalorder %s29, 2
    %s31 = scalar_select %p30, 0, %s29
    %s32 = smul.u32 %s19, 4
    %s33 = sadd.s32 %s32, %s20
    %s34 = smul.u32 %s31, 4
    %s35 = sadd.s32 %s34, %s27
    %s36 = ssub.s32 %s33, %s35
    %p37 = scmp.eq.s32.totalorder %s36, 0
    %s39 = sadd.s32 %s38, 1
    %s40 = scalar_select %p37, %s38, %s39
    %p43 = pneg %p37
    %p44 = scmp.eq.s32.totalorder %s12, 7
    %p45 = por %p43, %p44
    %p46 = scmp.ne.s32.totalorder %s38, %s41
    %p47 = scmp.eq.s32.totalorder %s12, 0
    %p48 = por %p46, %p47
    %p49 = scmp.ne.s32.totalorder %s38, %s41
    %p50 = scmp.eq.s32.totalorder %s17, 7
    %p51 = por %p49, %p50
    %p52 = scmp.ne.s32.totalorder %s41, %s42
    %p53 = scmp.eq.s32.totalorder %s17, 0
    %p54 = por %p52, %p53
    %p55 = scmp.ne.s32.totalorder %s41, %s42
    %p56 = scmp.eq.s32.totalorder %s18, 7
    %p57 = por %p55, %p56
    %p59 = scmp.ne.s32.totalorder %s42, %s58
    %p60 = scmp.eq.s32.totalorder %s18, 0
    %p61 = por %p59, %p60
    %s62 = smul.u32 %s19, 4
    %s63 = ssub.s32 %s20, 1
    %p64 = scmp.gt.s32.totalorder %s63, 0
    %s65 = scalar_select %p64, %s63, 0
    %s66 = sadd.s32 %s62, %s65
    %s67 = smul.u32 %s31, 4
    %s68 = ssub.s32 %s27, 1
    %p69 = scmp.gt.s32.totalorder %s68, 0
    %s70 = scalar_select %p69, %s68, 0
    %s71 = sadd.s32 %s67, %s70
    %s72 = ssub.s32 %s66, %s71
    %p73 = scmp.eq.s32.totalorder %s72, 0
    %s75 = sadd.s32 %s74, 1
    %s76 = scalar_select %p73, %s74, %s75
    %p79 = pneg %p73
    %p80 = scmp.eq.s32.totalorder %s12, 7
    %p81 = por %p79, %p80
    %p82 = scmp.ne.s32.totalorder %s74, %s77
    %p83 = scmp.eq.s32.totalorder %s12, 0
    %p84 = por %p82, %p83
    %p85 = scmp.ne.s32.totalorder %s74, %s77
    %p86 = scmp.eq.s32.totalorder %s17, 7
    %p87 = por %p85, %p86
    %p88 = scmp.ne.s32.totalorder %s77, %s78
    %p89 = scmp.eq.s32.totalorder %s17, 0
    %p90 = por %p88, %p89
    %p91 = scmp.ne.s32.totalorder %s77, %s78
    %p92 = scmp.eq.s32.totalorder %s18, 7
    %p93 = por %p91, %p92
    %p95 = scmp.ne.s32.totalorder %s78, %s94
    %p96 = scmp.eq.s32.totalorder %s18, 0
    %p97 = por %p95, %p96
    %s98 = smul.u32 %s19, 4
    %s99 = sadd.s32 %s20, 1
    %p100 = scmp.lt.s32.totalorder %s99, 3
    %s101 = scalar_select %p100, %s99, 3
    %s102 = sadd.s32 %s98, %s101
    %s103 = smul.u32 %s31, 4
    %s104 = sadd.s32 %s27, 1
    %p105 = scmp.lt.s32.totalorder %s104, 3
    %s106 = scalar_select %p105, %s104, 3
    %s107 = sadd.s32 %s103, %s106
    %s108 = ssub.s32 %s102, %s107
    %p109 = scmp.eq.s32.totalorder %s108, 0
    %s111 = sadd.s32 %s110, 1
    %s112 = scalar_select %p109, %s110, %s111
    %p115 = pneg %p109
    %p116 = scmp.eq.s32.totalorder %s12, 7
    %p117 = por %p115, %p116
    %p118 = scmp.ne.s32.totalorder %s110, %s113
    %p119 = scmp.eq.s32.totalorder %s12, 0
    %p120 = por %p118, %p119
    %p121 = scmp.ne.s32.totalorder %s110, %s113
    %p122 = scmp.eq.s32.totalorder %s17, 7
    %p123 = por %p121, %p122
    %p124 = scmp.ne.s32.totalorder %s113, %s114
    %p125 = scmp.eq.s32.totalorder %s17, 0
    %p126 = por %p124, %p125
    %p127 = scmp.ne.s32.totalorder %s113, %s114
    %p128 = scmp.eq.s32.totalorder %s18, 7
    %p129 = por %p127, %p128
    %p131 = scmp.ne.s32.totalorder %s114, %s130
    %p132 = scmp.eq.s32.totalorder %s18, 0
    %p133 = por %p131, %p132
    %s135 = sadd.s32 %s134, 1
    %p138 = scmp.eq.s32.totalorder %s12, 7
    %p139 = scmp.ne.s32.totalorder %s134, %s136
    %p140 = scmp.eq.s32.totalorder %s12, 0
    %p141 = por %p139, %p140
    %p142 = scmp.ne.s32.totalorder %s134, %s136
    %p143 = scmp.eq.s32.totalorder %s17, 7
    %p144 = por %p142, %p143
    %p145 = scmp.ne.s32.totalorder %s136, %s137
    %p146 = scmp.eq.s32.totalorder %s17, 0
    %p147 = por %p145, %p146
    %p148 = scmp.ne.s32.totalorder %s136, %s137
    %p149 = scmp.eq.s32.totalorder %s18, 7
    %p150 = por %p148, %p149
    %p152 = scmp.ne.s32.totalorder %s137, %s151
    %p153 = scmp.eq.s32.totalorder %s18, 0
    %p154 = por %p152, %p153
    %s155 = smul.u32 %s19, 4
    %s156 = sadd.s32 %s155, %s20
    %s157 = smul.u32 %s31, 4
    %s158 = sadd.s32 %s157, %s27
    %s159 = ssub.s32 %s156, %s158
    %p160 = scmp.eq.s32.totalorder %s159, 0
    %s162 = sadd.s32 %s161, 1
    %s163 = scalar_select %p160, %s161, %s162
    %p166 = pneg %p160
    %p167 = scmp.eq.s32.totalorder %s12, 7
    %p168 = por %p166, %p167
    %p169 = scmp.ne.s32.totalorder %s161, %s164
    %p170 = scmp.eq.s32.totalorder %s12, 0
    %p171 = por %p169, %p170
    %p172 = scmp.ne.s32.totalorder %s161, %s164
    %p173 = scmp.eq.s32.totalorder %s17, 7
    %p174 = por %p172, %p173
    %p175 = scmp.ne.s32.totalorder %s164, %s165
    %p176 = scmp.eq.s32.totalorder %s17, 0
    %p177 = por %p175, %p176
    %p178 = scmp.ne.s32.totalorder %s164, %s165
    %p179 = scmp.eq.s32.totalorder %s18, 7
    %p180 = por %p178, %p179
    %p182 = scmp.ne.s32.totalorder %s165, %s181
    %p183 = scmp.eq.s32.totalorder %s18, 0
    %p184 = por %p182, %p183
    %s185 = smul.u32 %s19, 4
    %s186 = sadd.s32 %s185, %s20
    %s187 = smul.u32 %s31, 4
    %s188 = sadd.s32 %s187, %s27
    %s189 = ssub.s32 %s186, %s188
    %p190 = scmp.eq.s32.totalorder %s189, 0
    %s192 = sadd.s32 %s191, 1
    %s193 = scalar_select %p190, %s191, %s192
    %p196 = pneg %p190
    %p197 = scmp.eq.s32.totalorder %s12, 7
    %p198 = por %p196, %p197
    %p199 = scmp.ne.s32.totalorder %s191, %s194
    %p200 = scmp.eq.s32.totalorder %s12, 0
    %p201 = por %p199, %p200
    %p202 = scmp.ne.s32.totalorder %s191, %s194
    %p203 = scmp.eq.s32.totalorder %s17, 7
    %p204 = por %p202, %p203
    %p205 = scmp.ne.s32.totalorder %s194, %s195
    %p206 = scmp.eq.s32.totalorder %s17, 0
    %p207 = por %p205, %p206
    %p208 = scmp.ne.s32.totalorder %s194, %s195
    %p209 = scmp.eq.s32.totalorder %s18, 7
    %p210 = por %p208, %p209
    %p212 = scmp.ne.s32.totalorder %s195, %s211
    %p213 = scmp.eq.s32.totalorder %s18, 0
    %p214 = por %p212, %p213
    %p215 = scmp.le.s32.totalorder 1, %s12
    %p216 = scmp.lt.s32.totalorder %s12, 9
    %p217 = pnand %p215, %p216
    %p218 = pneg %p217
    // Predicated region
    $region9: #{residual_block.3} parent=5 // pred_check
      _
    $region10: #{residual_block.3} parent=5 // pred_check_branch
      %220 = sbr.rel (%p217) target = $region12
    $region11: #{residual_block.3} parent=5 // pred_region
      %s221 = ssub.s32 %s12, 1
      // Predicated region
      $region13: #{residual_block.3} parent=11 // pred_check
        %p222 = pneg %p147
      $region14: #{residual_block.3} parent=11 // pred_check_branch
        %224 = sbr.rel (%p222) target = $region16
      $region15: #{residual_block.3} parent=11 // pred_region
        _
      $region16: #{residual_block.3} parent=11 // pred_fallthru
        _
    $region12: #{residual_block.3} parent=5 // pred_fallthru
      _
    %p225 = scmp.lt.s32.totalorder %s12, 8
    // Predicated region
    $region17: #{residual_block.3} parent=5 // pred_check
      %p226 = pneg %p225
    $region18: #{residual_block.3} parent=5 // pred_check_branch
      %228 = sbr.rel (%p226) target = $region20
    $region19: #{residual_block.3} parent=5 // pred_region
      // Predicated region
      $region21: #{residual_block.3} parent=19 // pred_check
        %p229 = pneg %p48
      $region22: #{residual_block.3} parent=19 // pred_check_branch
        %231 = sbr.rel (%p229) target = $region24
      $region23: #{residual_block.3} parent=19 // pred_region
        %s232 = smul.u32 %s19, 4
        %s233 = sadd.s32 %s232, %s20
        %p234 = scmp.lt.s32.totalorder %s233, 7
        %s235 = scalar_select %p234, %s233, 7
        %s236 = smul.addr %s235, 8
        %s237 = smul.addr %s236, 8
        %s238 = scalar_lea.vmem %s0, %s237
        %s239 = smul.u32 %s19, 4
        %s240 = sadd.s32 %s239, %s20
      $region24: #{residual_block.3} parent=19 // pred_fallthru
        _
      // Predicated region
      $region25: #{residual_block.3} parent=19 // pred_check
        %p241 = pneg %p84
      $region26: #{residual_block.3} parent=19 // pred_check_branch
        %243 = sbr.rel (%p241) target = $region28
      $region27: #{residual_block.3} parent=19 // pred_region
        %s244 = smul.u32 %s19, 4
        %s245 = ssub.s32 %s20, 1
        %p246 = scmp.gt.s32.totalorder %s245, 0
        %s247 = scalar_select %p246, %s245, 0
        %s248 = sadd.s32 %s244, %s247
        %p249 = scmp.lt.s32.totalorder %s248, 7
        %s250 = scalar_select %p249, %s248, 7
        %s251 = smul.addr %s250, 8
        %s252 = smul.addr %s251, 8
        %s253 = scalar_lea.vmem %s1, %s252
        %s254 = smul.u32 %s19, 4
        %s255 = ssub.s32 %s20, 1
        %p256 = scmp.gt.s32.totalorder %s255, 0
        %s257 = scalar_select %p256, %s255, 0
        %s258 = sadd.s32 %s254, %s257
      $region28: #{residual_block.3} parent=19 // pred_fallthru
        _
      // Predicated region
      $region29: #{residual_block.3} parent=19 // pred_check
        %p259 = pneg %p120
      $region30: #{residual_block.3} parent=19 // pred_check_branch
        %261 = sbr.rel (%p259) target = $region32
      $region31: #{residual_block.3} parent=19 // pred_region
        %s262 = smul.u32 %s19, 4
        %s263 = sadd.s32 %s20, 1
        %p264 = scmp.lt.s32.totalorder %s263, 3
        %s265 = scalar_select %p264, %s263, 3
        %s266 = sadd.s32 %s262, %s265
        %p267 = scmp.lt.s32.totalorder %s266, 7
        %s268 = scalar_select %p267, %s266, 7
        %s269 = smul.addr %s268, 8
        %s270 = smul.addr %s269, 8
        %s271 = scalar_lea.vmem %s2, %s270
        %s272 = smul.u32 %s19, 4
        %s273 = sadd.s32 %s20, 1
        %p274 = scmp.lt.s32.totalorder %s273, 3
        %s275 = scalar_select %p274, %s273, 3
        %s276 = sadd.s32 %s272, %s275
      $region32: #{residual_block.3} parent=19 // pred_fallthru
        _
    $region20: #{residual_block.3} parent=5 // pred_fallthru
      _
    %p277 = scmp.le.s32.totalorder 1, %s12
    %p278 = scmp.lt.s32.totalorder %s12, 9
    %p279 = pnand %p277, %p278
    %p280 = pneg %p279
    // Predicated region
    $region33: #{residual_block.3} parent=5 // pred_check
      _
    $region34: #{residual_block.3} parent=5 // pred_check_branch
      %282 = sbr.rel (%p279) target = $region36
    $region35: #{residual_block.3} parent=5 // pred_region
      %s283 = ssub.s32 %s12, 1
      %s284 = smul.u32 %s21, 4
      %s285 = sadd.s32 %s284, %s22
      %p286 = scmp.lt.s32.totalorder %s285, 7
      %s287 = scalar_select %p286, %s285, 7
      %s288 = smul.addr %s287, 8
      %s289 = smul.addr %s288, 8
      %s290 = scalar_lea.vmem %s0, %s289
      %p291 = pneg %p54
      %p292 = pneg %p51
      %s293 = smul.u32 %s21, 4
      %s294 = ssub.s32 %s22, 1
      %p295 = scmp.gt.s32.totalorder %s294, 0
      %s296 = scalar_select %p295, %s294, 0
      %s297 = sadd.s32 %s293, %s296
      %p298 = scmp.lt.s32.totalorder %s297, 7
      %s299 = scalar_select %p298, %s297, 7
      %s300 = smul.addr %s299, 8
      %s301 = smul.addr %s300, 8
      %s302 = scalar_lea.vmem %s1, %s301
      %p303 = pneg %p90
      %p304 = pneg %p87
      %s305 = smul.u32 %s21, 4
      %s306 = sadd.s32 %s22, 1
      %p307 = scmp.lt.s32.totalorder %s306, 3
      %s308 = scalar_select %p307, %s306, 3
      %s309 = sadd.s32 %s305, %s308
      %p310 = scmp.lt.s32.totalorder %s309, 7
      %s311 = scalar_select %p310, %s309, 7
      %s312 = smul.addr %s311, 8
      %s313 = smul.addr %s312, 8
      %s314 = scalar_lea.vmem %s2, %s313
      %p315 = pneg %p126
      %p316 = pneg %p123
      %p317 = pneg %p147
      %p318 = pneg %p144
      %p319 = pneg %p177
      %p320 = pneg %p174
      %s321 = smul.u32 %s21, 4
      %s322 = sadd.s32 %s321, %s22
      %p323 = scmp.lt.s32.totalorder %s322, 7
      %s324 = scalar_select %p323, %s322, 7
      %s325 = smul.addr %s324, 8
      %s326 = smul.addr %s325, 4
      %s327 = scalar_lea.vmem %s4, %s326
      %p328 = pneg %p207
      %p329 = pneg %p204
      %s330 = smul.u32 %s21, 4
      %s331 = sadd.s32 %s330, %s22
      %p332 = scmp.lt.s32.totalorder %s331, 7
      %s333 = scalar_select %p332, %s331, 7
      %s334 = smul.addr %s333, 2
      %s335 = scalar_lea.vmem %s5, %s334
      %s336 = smul.u32 %s21, 4
      %s337 = sadd.s32 %s336, %s22
      %p338 = scmp.lt.s32.totalorder %s337, 7
      %s339 = scalar_select %p338, %s337, 7
      %s340 = smul.addr %s339, 8
      %s341 = smul.addr %s340, 8
      %s342 = scalar_lea.vmem %s0, %s341
      %s343 = smul.u32 %s21, 4
      %s344 = sadd.s32 %s343, %s22
      %s345 = smul.u32 %s21, 4
      %s346 = ssub.s32 %s22, 1
      %p347 = scmp.gt.s32.totalorder %s346, 0
      %s348 = scalar_select %p347, %s346, 0
      %s349 = sadd.s32 %s345, %s348
      %p350 = scmp.lt.s32.totalorder %s349, 7
      %s351 = scalar_select %p350, %s349, 7
      %s352 = smul.addr %s351, 8
      %s353 = smul.addr %s352, 8
      %s354 = scalar_lea.vmem %s1, %s353
      %s355 = smul.u32 %s21, 4
      %s356 = ssub.s32 %s22, 1
      %p357 = scmp.gt.s32.totalorder %s356, 0
      %s358 = scalar_select %p357, %s356, 0
      %s359 = sadd.s32 %s355, %s358
      %s360 = smul.u32 %s21, 4
      %s361 = sadd.s32 %s22, 1
      %p362 = scmp.lt.s32.totalorder %s361, 3
      %s363 = scalar_select %p362, %s361, 3
      %s364 = sadd.s32 %s360, %s363
      %p365 = scmp.lt.s32.totalorder %s364, 7
      %s366 = scalar_select %p365, %s364, 7
      %s367 = smul.addr %s366, 8
      %s368 = smul.addr %s367, 8
      %s369 = scalar_lea.vmem %s2, %s368
      %s370 = smul.u32 %s21, 4
      %s371 = sadd.s32 %s22, 1
      %p372 = scmp.lt.s32.totalorder %s371, 3
      %s373 = scalar_select %p372, %s371, 3
      %s374 = sadd.s32 %s370, %s373
      %s375 = smul.u32 %s21, 4
      %s376 = sadd.s32 %s375, %s22
      %p377 = scmp.lt.s32.totalorder %s376, 7
      %s378 = scalar_select %p377, %s376, 7
      %s379 = smul.addr %s378, 8
      %s380 = smul.addr %s379, 4
      %s381 = scalar_lea.vmem %s4, %s380
      %s382 = smul.u32 %s21, 4
      %s383 = sadd.s32 %s382, %s22
      %s384 = smul.u32 %s21, 4
      %s385 = sadd.s32 %s384, %s22
      %p386 = scmp.lt.s32.totalorder %s385, 7
      %s387 = scalar_select %p386, %s385, 7
      %s388 = smul.addr %s387, 2
      %s389 = scalar_lea.vmem %s5, %s388
      %s390 = smul.u32 %s21, 4
      %s391 = sadd.s32 %s390, %s22
      %v393 = vld [vmem:[%s342] sm:$0xff]
      %v394 = vld [vmem:[%s342 + $0x8] sm:$0xff]
      %v395 = vld [vmem:[%s342 + $0x10] sm:$0xff]
      %v396 = vld [vmem:[%s342 + $0x18] sm:$0xff]
      %v397 = vld [vmem:[%s342 + $0x20] sm:$0xff]
      %v398 = vld [vmem:[%s342 + $0x28] sm:$0xff]
      %v399 = vld [vmem:[%s342 + $0x30] sm:$0xff]
      %v400 = vld [vmem:[%s342 + $0x38] sm:$0xff]
      %v401 = vpack.c.bf16 %v394, %v393
      %v402 = vpack.c.bf16 %v396, %v395
      %v403 = vpack.c.bf16 %v398, %v397
      %v404 = vpack.c.bf16 %v400, %v399
      %v405 = vld [vmem:[%s354 + $0x30] sm:$0xff]
      %v406 = vld [vmem:[%s354 + $0x38] sm:$0xff]
      %v407 = vld [vmem:[%s369] sm:$0xff]
      %v408 = vld [vmem:[%s369 + $0x8] sm:$0xff]
      %p409 = scmp.gt.s32.totalorder %s22, 0
      %s410 = scalar_select %p409, 1, 0
      %v411 = vstv %s410
      %vm412 = vcmp.eq.s32.totalorder %v411, 1
      %v413 = vsel %vm412, %v405, 0.0
      %v414 = vsel %vm412, %v406, 0.0
      %v415 = vpack.c.bf16 %v414, %v413
      %p416 = scmp.lt.s32.totalorder %s22, 3
      %s417 = scalar_select %p416, 1, 0
      %v418 = vstv %s417
      %vm419 = vcmp.eq.s32.totalorder %v418, 1
      %v420 = vsel %vm419, %v407, 0.0
      %v421 = vsel %vm419, %v408, 0.0
      %v422 = vpack.c.bf16 %v421, %v420
      %v424 = vshrl.u32 %v415, 16
      %v426 = vrot.slane %v424, 7
      %v427 = vshll.u32 %v415, 16
      %v429 = vor.u32 %v426, %v427
      %v431 = vshrl.u32 %v401, 16
      %v433 = vrot.slane %v431, 7
      %v434 = vshll.u32 %v401, 16
      %v436 = vor.u32 %v433, %v434
      %v438 = vshrl.u32 %v402, 16
      %v440 = vrot.slane %v438, 7
      %v441 = vshll.u32 %v402, 16
      %v443 = vor.u32 %v440, %v441
      %v445 = vshrl.u32 %v403, 16
      %v447 = vrot.slane %v445, 7
      %v448 = vshll.u32 %v403, 16
      %v450 = vor.u32 %v447, %v448
      %v452 = vshrl.u32 %v404, 16
      %v454 = vrot.slane %v452, 7
      %v455 = vshll.u32 %v404, 16
      %v457 = vor.u32 %v454, %v455
      %v459 = vshrl.u32 %v422, 16
      %v461 = vrot.slane %v459, 7
      %v462 = vshll.u32 %v422, 16
      %v464 = vor.u32 %v461, %v462
      %vm477 = vcmask 1040384
      %vm478 = vsmask.f32 256
      %vm479 = vmand %vm477, %vm478
      %v480 = vsel %vm479, 0, %v429
      %v481 = vsel %vm479, 0, %v436
      %v482 = vsel %vm479, 0, %v443
      %v483 = vsel %vm479, 0, %v450
      %v484 = vsel %vm479, 0, %v457
      %v485 = vsel %vm479, 0, %v464
      %v486 = vsel %vm479, %v426, 0
      %v487 = vsel %vm479, %v433, 0
      %v488 = vsel %vm479, %v440, 0
      %v489 = vsel %vm479, %v447, 0
      %v490 = vsel %vm479, %v454, 0
      %v491 = vsel %vm479, %v461, 0
      %vm492 = vsmask.f32 7424
      %v494 = vshrl.u32 %v480, 16
      %v496 = vshll.u32 %v480, 16
      %v498 = vrot.slane %v496, 1
      %v499 = vor.u32 %v494, %v498
      %v501 = vshll.u32 %v486, 16
      %v503 = vrot.slane %v501, 1
      %v504 = vsel %vm492, %v499, %v503
      %v506 = vshrl.u32 %v481, 16
      %v508 = vshll.u32 %v481, 16
      %v510 = vrot.slane %v508, 1
      %v511 = vor.u32 %v506, %v510
      %v513 = vshll.u32 %v487, 16
      %v515 = vrot.slane %v513, 1
      %v516 = vsel %vm492, %v511, %v515
      %v518 = vshrl.u32 %v482, 16
      %v520 = vshll.u32 %v482, 16
      %v522 = vrot.slane %v520, 1
      %v523 = vor.u32 %v518, %v522
      %v525 = vshll.u32 %v488, 16
      %v527 = vrot.slane %v525, 1
      %v528 = vsel %vm492, %v523, %v527
      %v530 = vshrl.u32 %v483, 16
      %v532 = vshll.u32 %v483, 16
      %v534 = vrot.slane %v532, 1
      %v535 = vor.u32 %v530, %v534
      %v537 = vshll.u32 %v489, 16
      %v539 = vrot.slane %v537, 1
      %v540 = vsel %vm492, %v535, %v539
      %541 = vrot.lane.b32.xlu0 %v504, 4
      %v542 = vpop.permute.xlu0 %541
      %543 = vrot.lane.b32.xlu0 %v516, 4
      %v544 = vpop.permute.xlu0 %543
      %545 = vrot.lane.b32.xlu0 %v528, 4
      %v546 = vpop.permute.xlu0 %545
      %547 = vrot.lane.b32.xlu0 %v540, 4
      %v548 = vpop.permute.xlu0 %547
      %vm557 = vcmask 1046528
      %v558 = vrot.slane %v480, 1
      %v559 = vrot.slane %v486, 1
      %v560 = vsel %vm557, %v558, %v559
      %v561 = vrot.slane %v481, 1
      %v562 = vrot.slane %v487, 1
      %v563 = vsel %vm557, %v561, %v562
      %v564 = vrot.slane %v482, 1
      %v565 = vrot.slane %v488, 1
      %v566 = vsel %vm557, %v564, %v565
      %v567 = vrot.slane %v483, 1
      %v568 = vrot.slane %v489, 1
      %v569 = vsel %vm557, %v567, %v568
      %570 = vrot.lane.b32.xlu0 %v560, 8
      %v571 = vpop.permute.xlu0 %570
      %572 = vrot.lane.b32.xlu0 %v563, 8
      %v573 = vpop.permute.xlu0 %572
      %574 = vrot.lane.b32.xlu0 %v566, 8
      %v575 = vpop.permute.xlu0 %574
      %576 = vrot.lane.b32.xlu0 %v569, 8
      %v577 = vpop.permute.xlu0 %576
      %579 = vrot.lane.b32.xlu0 %v481, 12
      %v580 = vpop.permute.xlu0 %579
      %581 = vrot.lane.b32.xlu0 %v482, 12
      %v582 = vpop.permute.xlu0 %581
      %583 = vrot.lane.b32.xlu0 %v483, 12
      %v584 = vpop.permute.xlu0 %583
      %585 = vrot.lane.b32.xlu0 %v484, 12
      %v586 = vpop.permute.xlu0 %585
      %v588 = vshrl.u32 %v484, 16
      %v590 = vshll.u32 %v484, 16
      %v592 = vrot.slane %v590, 1
      %v593 = vor.u32 %v588, %v592
      %v595 = vshll.u32 %v490, 16
      %v597 = vrot.slane %v595, 1
      %v598 = vsel %vm492, %v593, %v597
      %599 = vrot.lane.b32.xlu0 %v516, 16
      %v600 = vpop.permute.xlu0 %599
      %601 = vrot.lane.b32.xlu0 %v528, 16
      %v602 = vpop.permute.xlu0 %601
      %603 = vrot.lane.b32.xlu0 %v540, 16
      %v604 = vpop.permute.xlu0 %603
      %605 = vrot.lane.b32.xlu0 %v598, 16
      %v606 = vpop.permute.xlu0 %605
      %v608 = vrot.slane %v484, 1
      %v609 = vrot.slane %v490, 1
      %v610 = vsel %vm557, %v608, %v609
      %611 = vrot.lane.b32.xlu0 %v563, 20
      %v612 = vpop.permute.xlu0 %611
      %613 = vrot.lane.b32.xlu0 %v566, 20
      %v614 = vpop.permute.xlu0 %613
      %615 = vrot.lane.b32.xlu0 %v569, 20
      %v616 = vpop.permute.xlu0 %615
      %617 = vrot.lane.b32.xlu0 %v610, 20
      %v618 = vpop.permute.xlu0 %617
      %620 = vrot.lane.b32.xlu0 %v482, 24
      %v621 = vpop.permute.xlu0 %620
      %622 = vrot.lane.b32.xlu0 %v483, 24
      %v623 = vpop.permute.xlu0 %622
      %624 = vrot.lane.b32.xlu0 %v484, 24
      %v625 = vpop.permute.xlu0 %624
      %626 = vrot.lane.b32.xlu0 %v485, 24
      %v627 = vpop.permute.xlu0 %626
      %v629 = vshrl.u32 %v485, 16
      %v631 = vshll.u32 %v485, 16
      %v633 = vrot.slane %v631, 1
      %v634 = vor.u32 %v629, %v633
      %v636 = vshll.u32 %v491, 16
      %v638 = vrot.slane %v636, 1
      %v639 = vsel %vm492, %v634, %v638
      %640 = vrot.lane.b32.xlu0 %v528, 28
      %v641 = vpop.permute.xlu0 %640
      %642 = vrot.lane.b32.xlu0 %v540, 28
      %v643 = vpop.permute.xlu0 %642
      %644 = vrot.lane.b32.xlu0 %v598, 28
      %v645 = vpop.permute.xlu0 %644
      %646 = vrot.lane.b32.xlu0 %v639, 28
      %v647 = vpop.permute.xlu0 %646
      %v649 = vrot.slane %v485, 1
      %v650 = vrot.slane %v491, 1
      %v651 = vsel %vm557, %v649, %v650
      %652 = vrot.lane.b32.xlu0 %v566, 32
      %v653 = vpop.permute.xlu0 %652
      %654 = vrot.lane.b32.xlu0 %v569, 32
      %v655 = vpop.permute.xlu0 %654
      %656 = vrot.lane.b32.xlu0 %v610, 32
      %v657 = vpop.permute.xlu0 %656
      %658 = vrot.lane.b32.xlu0 %v651, 32
      %v659 = vpop.permute.xlu0 %658
      %vm660 = vcmask 31744
      %v662 = vsel %vm660, %v480, %v542
      %v664 = vsel %vm660, %v481, %v544
      %v666 = vsel %vm660, %v482, %v546
      %v668 = vsel %vm660, %v483, %v548
      %vm669 = vcmask 64512
      %v671 = vsel %vm669, %v662, %v571
      %v673 = vsel %vm669, %v664, %v573
      %v675 = vsel %vm669, %v666, %v575
      %v677 = vsel %vm669, %v668, %v577
      %vm678 = vcmask 97280
      %v680 = vsel %vm678, %v671, %v580
      %v682 = vsel %vm678, %v673, %v582
      %v684 = vsel %vm678, %v675, %v584
      %v686 = vsel %vm678, %v677, %v586
      %vm687 = vcmask 130048
      %v689 = vsel %vm687, %v680, %v600
      %v691 = vsel %vm687, %v682, %v602
      %v693 = vsel %vm687, %v684, %v604
      %v695 = vsel %vm687, %v686, %v606
      %vm696 = vcmask 162816
      %v698 = vsel %vm696, %v689, %v612
      %v700 = vsel %vm696, %v691, %v614
      %v702 = vsel %vm696, %v693, %v616
      %v704 = vsel %vm696, %v695, %v618
      %vm705 = vcmask 195584
      %v707 = vsel %vm705, %v698, %v621
      %v709 = vsel %vm705, %v700, %v623
      %v711 = vsel %vm705, %v702, %v625
      %v713 = vsel %vm705, %v704, %v627
      %vm714 = vcmask 228352
      %v716 = vsel %vm714, %v707, %v641
      %v718 = vsel %vm714, %v709, %v643
      %v720 = vsel %vm714, %v711, %v645
      %v722 = vsel %vm714, %v713, %v647
      %vm723 = vcmask 261120
      %v725 = vsel %vm723, %v716, %v653
      %v727 = vsel %vm723, %v718, %v655
      %v729 = vsel %vm723, %v720, %v657
      %v731 = vsel %vm723, %v722, %v659
      %v732 = vld [vmem:[%s3] sm:$0xf]
      %v733 = vld [vmem:[%s3 + $0x4] sm:$0xf]
      %v734 = vld [vmem:[%s3 + $0x8] sm:$0xf]
      %v735 = vld [vmem:[%s3 + $0xc] sm:$0xf]
      %v736 = vld [vmem:[%s3 + $0x10] sm:$0x3]
      %v742 = vunpack.c.l.b16 %v732
      %v743 = vunpack.c.l.b16 %v733
      %v744 = vunpack.c.l.b16 %v734
      %v745 = vunpack.c.l.b16 %v735
      %v746 = vunpack.c.l.b16 %v736
      %v747 = vpack.c.b16 %v743, %v742
      %v748 = vpack.c.b16 %v745, %v744
      %v749 = vpack.c.b16 %v746, %v746
      %vm752 = vcmask 293888
      %v753 = vsel %vm752, %v725, 0
      %v755 = vsel %vm752, %v727, 0
      %v757 = vsel %vm752, %v729, 0
      %v759 = vsel %vm752, %v731, 0
      %vm761 = vcmask 1041408
      %v763 = vsel %vm761, %v749, 0
      %765 = vmatprep.subr.bf16.mxu0 0
      %766 = vmatpush1.bf16.msra.mxu0 0
      %767 = vmatprep.subr.bf16.mxu0 0
      %768 = vmatpush1.bf16.msra.mxu0 0
      %769 = vmatprep.subr.bf16.mxu0 0
      %770 = vmatpush1.bf16.msra.mxu0 0
      %771 = vmatprep.subr.bf16.mxu0 0
      %772 = vmatpush1.bf16.msra.mxu0 0
      %773 = vmatprep.subr.bf16.mxu0 0
      %774 = vmatpush1.bf16.msra.mxu0 0
      %775 = vmatprep.subr.bf16.mxu0 0
      %776 = vmatpush1.bf16.msra.mxu0 %v763
      %777 = vmatprep.subr.bf16.mxu0 0
      %778 = vmatpush1.bf16.msra.mxu0 %v748
      %779 = vmatprep.subr.bf16.mxu0 0
      %780 = vmatpush1.bf16.msra.mxu0 %v747
      %781 = vmatprep.subr.bf16.mxu0 0
      %782 = vmatpush2.bf16.msra.mxu0 0
      %783 = vmatprep.subr.bf16.mxu0 0
      %784 = vmatpush2.bf16.msra.mxu0 0
      %785 = vmatprep.subr.bf16.mxu0 0
      %786 = vmatpush2.bf16.msra.mxu0 0
      %787 = vmatprep.subr.bf16.mxu0 0
      %788 = vmatpush2.bf16.msra.mxu0 0
      %789 = vmatprep.subr.bf16.mxu0 0
      %790 = vmatpush2.bf16.msra.mxu0 0
      %791 = vmatprep.subr.bf16.mxu0 0
      %792 = vmatpush2.bf16.msra.mxu0 0
      %793 = vmatprep.subr.bf16.mxu0 0
      %794 = vmatpush2.bf16.msra.mxu0 0
      %795 = vmatprep.subr.bf16.mxu0 0
      %796 = vmatpush2.bf16.msra.mxu0 0
      %797 = vmatprep.mubr.bf16.mxu0 0
      %798 = vmatmul.mubr.bf16.gmra.mxu0 %v753
      %v799 = vpop.f32.mrf.mxu0
      %v800 = vadd.f32 0.0, %v799
      %v801 = vpop.f32.mrf.mxu0
      %v802 = vpop.f32.mrf.mxu0
      %v803 = vadd.f32 0.0, %v802
      %v804 = vpop.f32.mrf.mxu0
      %805 = vmatprep.mubr.bf16.mxu0 0
      %806 = vmatmul.mubr.bf16.gmra.mxu0 %v755
      %v807 = vpop.f32.mrf.mxu0
      %v808 = vadd.f32 0.0, %v807
      %v809 = vpop.f32.mrf.mxu0
      %v810 = vpop.f32.mrf.mxu0
      %v811 = vadd.f32 0.0, %v810
      %v812 = vpop.f32.mrf.mxu0
      %813 = vmatprep.mubr.bf16.mxu0 0
      %814 = vmatmul.mubr.bf16.gmra.mxu0 %v757
      %v815 = vpop.f32.mrf.mxu0
      %v816 = vadd.f32 0.0, %v815
      %v817 = vpop.f32.mrf.mxu0
      %v818 = vpop.f32.mrf.mxu0
      %v819 = vadd.f32 0.0, %v818
      %v820 = vpop.f32.mrf.mxu0
      %821 = vmatprep.mubr.bf16.mxu0 0
      %822 = vmatmul.mubr.bf16.gmra.mxu0 %v759
      %v823 = vpop.f32.mrf.mxu0
      %v824 = vadd.f32 0.0, %v823
      %v825 = vpop.f32.mrf.mxu0
      %v826 = vpop.f32.mrf.mxu0
      %v827 = vadd.f32 0.0, %v826
      %v828 = vpop.f32.mrf.mxu0
      %829 = vdwg.mxu0
      %v830 = vsel %vm660, %v800, 0.0
      %v831 = vsel %vm660, %v803, 0.0
      %v832 = vadd.f32 %v830, %v831
      %v833 = vsel %vm660, %v808, 0.0
      %v834 = vadd.f32 %v832, %v833
      %v835 = vsel %vm660, %v811, 0.0
      %v836 = vadd.f32 %v834, %v835
      %v837 = vsel %vm660, %v816, 0.0
      %v838 = vadd.f32 %v836, %v837
      %v839 = vsel %vm660, %v819, 0.0
      %v840 = vadd.f32 %v838, %v839
      %v841 = vsel %vm660, %v824, 0.0
      %v842 = vadd.f32 %v840, %v841
      %v843 = vsel %vm660, %v827, 0.0
      %v844 = vadd.f32 %v842, %v843
      %v845 = vrot.slane %v844, 4
      %v846 = vadd.f32 %v844, %v845
      %v847 = vrot.slane %v846, 2
      %v848 = vadd.f32 %v846, %v847
      %v849 = vrot.slane %v848, 1
      %v850 = vadd.f32 %v848, %v849
      %v851 = vmul.f32 %v800, %v800
      %v852 = vmul.f32 %v803, %v803
      %v853 = vmul.f32 %v808, %v808
      %v854 = vmul.f32 %v811, %v811
      %v855 = vmul.f32 %v816, %v816
      %v856 = vmul.f32 %v819, %v819
      %v857 = vmul.f32 %v824, %v824
      %v858 = vmul.f32 %v827, %v827
      %v859 = vsel %vm660, %v851, 0.0
      %v860 = vsel %vm660, %v852, 0.0
      %v861 = vadd.f32 %v859, %v860
      %v862 = vsel %vm660, %v853, 0.0
      %v863 = vadd.f32 %v861, %v862
      %v864 = vsel %vm660, %v854, 0.0
      %v865 = vadd.f32 %v863, %v864
      %v866 = vsel %vm660, %v855, 0.0
      %v867 = vadd.f32 %v865, %v866
      %v868 = vsel %vm660, %v856, 0.0
      %v869 = vadd.f32 %v867, %v868
      %v870 = vsel %vm660, %v857, 0.0
      %v871 = vadd.f32 %v869, %v870
      %v872 = vsel %vm660, %v858, 0.0
      %v873 = vadd.f32 %v871, %v872
      %v874 = vrot.slane %v873, 4
      %v875 = vadd.f32 %v873, %v874
      %v876 = vrot.slane %v875, 2
      %v877 = vadd.f32 %v875, %v876
      %v878 = vrot.slane %v877, 1
      %v879 = vadd.f32 %v877, %v878
      %vm880 = vcmask 1040384
      %v881 = vsel %vm880, %v850, %v879
      %vm882 = vcmask 25600
      %883 = vst.msk [vmem:[%s389] sm:$0x3] %vm882, %v881
      %v884 = vpack.c.bf16 %v803, %v800
      %v885 = vpack.c.bf16 %v811, %v808
      %v886 = vpack.c.bf16 %v819, %v816
      %v887 = vpack.c.bf16 %v827, %v824
      %v892 = vunpack.c.l.b16 %v884
      %v893 = vunpack.c.h.b16 %v884
      %v894 = vunpack.c.l.b16 %v885
      %v895 = vunpack.c.h.b16 %v885
      %v896 = vunpack.c.l.b16 %v886
      %v897 = vunpack.c.h.b16 %v886
      %v898 = vunpack.c.l.b16 %v887
      %v899 = vunpack.c.h.b16 %v887
      %v900 = vpack.c.b16 %v892, %v892
      %v901 = vpack.c.b16 %v893, %v893
      %v902 = vpack.c.b16 %v894, %v894
      %v903 = vpack.c.b16 %v895, %v895
      %v904 = vpack.c.b16 %v896, %v896
      %v905 = vpack.c.b16 %v897, %v897
      %v906 = vpack.c.b16 %v898, %v898
      %v907 = vpack.c.b16 %v899, %v899
      %vm916 = vcmask 27648
      %917 = vst.msk [vmem:[%s381] sm:$0xf] %vm916, %v900
      %918 = vst.msk [vmem:[%s381 + $0x4] sm:$0xf] %vm916, %v901
      %919 = vst.msk [vmem:[%s381 + $0x8] sm:$0xf] %vm916, %v902
      %920 = vst.msk [vmem:[%s381 + $0xc] sm:$0xf] %vm916, %v903
      %921 = vst.msk [vmem:[%s381 + $0x10] sm:$0xf] %vm916, %v904
      %922 = vst.msk [vmem:[%s381 + $0x14] sm:$0xf] %vm916, %v905
      %923 = vst.msk [vmem:[%s381 + $0x18] sm:$0xf] %vm916, %v906
      %924 = vst.msk [vmem:[%s381 + $0x1c] sm:$0xf] %vm916, %v907
      %s925 = smul.u32 %s21, 4
      %s926 = sadd.s32 %s925, %s22
      %p927 = scmp.lt.s32.totalorder %s926, 7
      %s928 = scalar_select %p927, %s926, 7
      %s929 = smul.addr %s928, 8
      %s930 = smul.addr %s929, 4
      %s931 = scalar_lea.vmem %s4, %s930
      %s932 = smul.u32 %s21, 4
      %s933 = sadd.s32 %s932, %s22
      %p934 = scmp.lt.s32.totalorder %s933, 7
      %s935 = scalar_select %p934, %s933, 7
      %s936 = smul.addr %s935, 2
      %s937 = scalar_lea.vmem %s5, %s936
      // Predicated region
      $region37: #{residual_block.3} parent=35 // pred_check
        %p938 = pneg %p174
      $region38: #{residual_block.3} parent=35 // pred_check_branch
        %940 = sbr.rel (%p938) target = $region40
      $region39: #{residual_block.3} parent=35 // pred_region
        %s941 = smul.u32 %s21, 4
        %s942 = sadd.s32 %s941, %s22
      $region40: #{residual_block.3} parent=35 // pred_fallthru
        _
      // Predicated region
      $region41: #{residual_block.3} parent=35 // pred_check
        %p943 = pneg %p204
      $region42: #{residual_block.3} parent=35 // pred_check_branch
        %945 = sbr.rel (%p943) target = $region44
      $region43: #{residual_block.3} parent=35 // pred_region
        %s946 = smul.u32 %s21, 4
        %s947 = sadd.s32 %s946, %s22
      $region44: #{residual_block.3} parent=35 // pred_fallthru
        _
    $region36: #{residual_block.3} parent=5 // pred_fallthru
      _
    %p948 = scmp.le.s32.totalorder 2, %s12
    // Predicated region
    $region45: #{residual_block.3} parent=5 // pred_check
      %p949 = pneg %p948
    $region46: #{residual_block.3} parent=5 // pred_check_branch
      %951 = sbr.rel (%p949) target = $region48
    $region47: #{residual_block.3} parent=5 // pred_region
      %s952 = ssub.s32 %s12, 2
      // Predicated region
      $region49: #{residual_block.3} parent=47 // pred_check
        %p953 = pneg %p180
      $region50: #{residual_block.3} parent=47 // pred_check_branch
        %955 = sbr.rel (%p953) target = $region52
      $region51: #{residual_block.3} parent=47 // pred_region
        %s956 = smul.u32 %s23, 4
        %s957 = sadd.s32 %s956, %s24
        %p958 = scmp.lt.s32.totalorder %s957, 7
        %s959 = scalar_select %p958, %s957, 7
        %s960 = smul.addr %s959, 8
        %s961 = smul.addr %s960, 4
        %s962 = scalar_lea.vmem %s4, %s961
      $region52: #{residual_block.3} parent=47 // pred_fallthru
        _
      // Predicated region
      $region53: #{residual_block.3} parent=47 // pred_check
        %p963 = pneg %p210
      $region54: #{residual_block.3} parent=47 // pred_check_branch
        %965 = sbr.rel (%p963) target = $region56
      $region55: #{residual_block.3} parent=47 // pred_region
        %s966 = smul.u32 %s23, 4
        %s967 = sadd.s32 %s966, %s24
        %p968 = scmp.lt.s32.totalorder %s967, 7
        %s969 = scalar_select %p968, %s967, 7
        %s970 = smul.addr %s969, 2
        %s971 = scalar_lea.vmem %s5, %s970
      $region56: #{residual_block.3} parent=47 // pred_fallthru
        _
    $region48: #{residual_block.3} parent=5 // pred_fallthru
      _
  $region6: #{residual_block.3} parent=0 // loop_footer
    %s16 = sadd.s32 1, %s12
  $region7: #{residual_block.3} parent=0 // loop_footer_branch
    %11 = sbr.rel target = $region3
  $region8: #{residual_block.3} parent=0 // loop_exit
    _

// kernel: tile.14
$region0: #{tile.14}
  #allocation0 [shape = 's32[1]{0}', space=sflag, size = 0x4, scoped, tag = 'scoped memory for tile.14']
  %s0 = inlined_call_operand.vmem [shape: f32[4], index: 0, kind: input, shape index: {}]
  %s1 = inlined_call_operand.vmem [shape: f32[32,4], index: 1, kind: output, shape index: {}]
  // Predicated region
  $region2: #{tile.14} parent=0 // pred_check
    _
  $region3: #{tile.14} parent=0 // pred_check_branch
    %3 = sbr.rel (0) target = $region5
  $region4: #{tile.14} parent=0 // pred_region
    _
  $region5: #{tile.14} parent=0 // pred_fallthru
    _
  %v4 = vld [vmem:[%s0] ss:$0 sm:$0xff]
  %5 = vst [vmem:[%s1] sm:$0xff] %v4
  %s6 = scalar_lea.vmem %s1, 8
  %7 = vst [vmem:[%s6] sm:$0xff] %v4
  %s8 = scalar_lea.vmem %s1, 16
  %9 = vst [vmem:[%s8] sm:$0xff] %v4
  %s10 = scalar_lea.vmem %s1, 24
  %11 = vst [vmem:[%s10] sm:$0xff] %v4

// kernel: residual_block.4
$region0: #{residual_block.4}
  #allocation0 [shape = 'u32[]', space=smem, size = 0x4, offset = 0x4, fixed_abs, tag = 'smem constant byte address 0x4 - core index']
  #allocation1 [shape = 'u32[144,128]{1,0:T(1,128)}', space=vmem, size = 0x12000, scoped, tag = 'internal scratch']
  %s0 = inlined_call_operand.vmem [shape: bf16[8,64,4], index: 0, kind: input, shape index: {}, may-alias: {0,1,2}]
  %s1 = inlined_call_operand.vmem [shape: bf16[8,64,4], index: 1, kind: input, shape index: {}, may-alias: {0,1,2}]
  %s2 = inlined_call_operand.vmem [shape: bf16[8,64,4], index: 2, kind: input, shape index: {}, may-alias: {0,1,2}]
  %s3 = inlined_call_operand.vmem [shape: f32[1,4], index: 3, kind: input, shape index: {}]
  %s4 = inlined_call_operand.vmem [shape: f32[1,4], index: 4, kind: input, shape index: {}]
  %s5 = inlined_call_operand.vmem [shape: bf16[36,4], index: 5, kind: input, shape index: {}]
  %s6 = inlined_call_operand.vmem [shape: bf16[8,64,4], index: 6, kind: output, shape index: {0}]
  %s7 = inlined_call_operand.vmem [shape: f32[8,2,4], index: 7, kind: output, shape index: {1}]
  %8 = xla_tuple %s6, %s7
  %s9 = sld [smem:[#allocation0]]
  $region65: #{residual_block.4} parent=0
    _
  %s11 = ssub.s32 1, %s9
  %s12 = scalar_select 0, %s11, %s9
  loop: start=0, step=1, limit=10
  $region2: #{residual_block.4} parent=0 // loop_pre_header
    _
  $region3: #{residual_block.4} parent=0 // loop_header
    %s14 = sphi 0, %s18
    %p15 = scmp.ge.s32.totalorder %s14, 10
    %s21 = sphi 0, %s33
    %s22 = sphi 0, %s29
    %s23 = sphi 0, %s21
    %s24 = sphi 0, %s22
    %s25 = sphi 0, %s23
    %s26 = sphi 0, %s24
    %s40 = sphi 0, %s42
    %s43 = sphi 0, %s40
    %s44 = sphi 0, %s43
    %s60 = sphi 0, %s44
    %s76 = sphi 0, %s78
    %s79 = sphi 0, %s76
    %s80 = sphi 0, %s79
    %s96 = sphi 0, %s80
    %s112 = sphi 0, %s114
    %s115 = sphi 0, %s112
    %s116 = sphi 0, %s115
    %s132 = sphi 0, %s116
    %s136 = sphi 0, %s136
    %s138 = sphi 0, %s136
    %s139 = sphi 0, %s138
    %s153 = sphi 0, %s139
    %s157 = sphi 0, %s157
    %s159 = sphi 0, %s157
    %s160 = sphi 0, %s159
    %s174 = sphi 0, %s160
    %s178 = sphi 0, %s178
    %s180 = sphi 0, %s178
    %s181 = sphi 0, %s180
    %s195 = sphi 0, %s181
    %s205 = sphi 0, %s207
    %s208 = sphi 0, %s205
    %s209 = sphi 0, %s208
    %s225 = sphi 0, %s209
    %s235 = sphi 0, %s237
    %s238 = sphi 0, %s235
    %s239 = sphi 0, %s238
    %s255 = sphi 0, %s239
  $region4: #{residual_block.4} parent=0 // loop_header_branch
    %17 = sbr.rel (%p15) target = $region8
  $region5: #{residual_block.4} parent=0 // loop_body
    %s19 = ssub.s32 %s14, 1
    %s20 = ssub.s32 %s14, 2
    %s27 = sadd.s32 1, %s22
    %p28 = scmp.ge.s32.totalorder %s27, 4
    %s29 = scalar_select %p28, 0, %s27
    %s30 = sadd.s32 1, %s21
    %s31 = scalar_select %p28, %s30, %s21
    %p32 = scmp.ge.s32.totalorder %s31, 2
    %s33 = scalar_select %p32, 0, %s31
    %s34 = smul.u32 %s21, 4
    %s35 = sadd.s32 %s34, %s22
    %s36 = smul.u32 %s33, 4
    %s37 = sadd.s32 %s36, %s29
    %s38 = ssub.s32 %s35, %s37
    %p39 = scmp.eq.s32.totalorder %s38, 0
    %s41 = sadd.s32 %s40, 1
    %s42 = scalar_select %p39, %s40, %s41
    %p45 = pneg %p39
    %p46 = scmp.eq.s32.totalorder %s14, 7
    %p47 = por %p45, %p46
    %p48 = scmp.ne.s32.totalorder %s40, %s43
    %p49 = scmp.eq.s32.totalorder %s14, 0
    %p50 = por %p48, %p49
    %p51 = scmp.ne.s32.totalorder %s40, %s43
    %p52 = scmp.eq.s32.totalorder %s19, 7
    %p53 = por %p51, %p52
    %p54 = scmp.ne.s32.totalorder %s43, %s44
    %p55 = scmp.eq.s32.totalorder %s19, 0
    %p56 = por %p54, %p55
    %p57 = scmp.ne.s32.totalorder %s43, %s44
    %p58 = scmp.eq.s32.totalorder %s20, 7
    %p59 = por %p57, %p58
    %p61 = scmp.ne.s32.totalorder %s44, %s60
    %p62 = scmp.eq.s32.totalorder %s20, 0
    %p63 = por %p61, %p62
    %s64 = smul.u32 %s21, 4
    %s65 = ssub.s32 %s22, 1
    %p66 = scmp.gt.s32.totalorder %s65, 0
    %s67 = scalar_select %p66, %s65, 0
    %s68 = sadd.s32 %s64, %s67
    %s69 = smul.u32 %s33, 4
    %s70 = ssub.s32 %s29, 1
    %p71 = scmp.gt.s32.totalorder %s70, 0
    %s72 = scalar_select %p71, %s70, 0
    %s73 = sadd.s32 %s69, %s72
    %s74 = ssub.s32 %s68, %s73
    %p75 = scmp.eq.s32.totalorder %s74, 0
    %s77 = sadd.s32 %s76, 1
    %s78 = scalar_select %p75, %s76, %s77
    %p81 = pneg %p75
    %p82 = scmp.eq.s32.totalorder %s14, 7
    %p83 = por %p81, %p82
    %p84 = scmp.ne.s32.totalorder %s76, %s79
    %p85 = scmp.eq.s32.totalorder %s14, 0
    %p86 = por %p84, %p85
    %p87 = scmp.ne.s32.totalorder %s76, %s79
    %p88 = scmp.eq.s32.totalorder %s19, 7
    %p89 = por %p87, %p88
    %p90 = scmp.ne.s32.totalorder %s79, %s80
    %p91 = scmp.eq.s32.totalorder %s19, 0
    %p92 = por %p90, %p91
    %p93 = scmp.ne.s32.totalorder %s79, %s80
    %p94 = scmp.eq.s32.totalorder %s20, 7
    %p95 = por %p93, %p94
    %p97 = scmp.ne.s32.totalorder %s80, %s96
    %p98 = scmp.eq.s32.totalorder %s20, 0
    %p99 = por %p97, %p98
    %s100 = smul.u32 %s21, 4
    %s101 = sadd.s32 %s22, 1
    %p102 = scmp.lt.s32.totalorder %s101, 3
    %s103 = scalar_select %p102, %s101, 3
    %s104 = sadd.s32 %s100, %s103
    %s105 = smul.u32 %s33, 4
    %s106 = sadd.s32 %s29, 1
    %p107 = scmp.lt.s32.totalorder %s106, 3
    %s108 = scalar_select %p107, %s106, 3
    %s109 = sadd.s32 %s105, %s108
    %s110 = ssub.s32 %s104, %s109
    %p111 = scmp.eq.s32.totalorder %s110, 0
    %s113 = sadd.s32 %s112, 1
    %s114 = scalar_select %p111, %s112, %s113
    %p117 = pneg %p111
    %p118 = scmp.eq.s32.totalorder %s14, 7
    %p119 = por %p117, %p118
    %p120 = scmp.ne.s32.totalorder %s112, %s115
    %p121 = scmp.eq.s32.totalorder %s14, 0
    %p122 = por %p120, %p121
    %p123 = scmp.ne.s32.totalorder %s112, %s115
    %p124 = scmp.eq.s32.totalorder %s19, 7
    %p125 = por %p123, %p124
    %p126 = scmp.ne.s32.totalorder %s115, %s116
    %p127 = scmp.eq.s32.totalorder %s19, 0
    %p128 = por %p126, %p127
    %p129 = scmp.ne.s32.totalorder %s115, %s116
    %p130 = scmp.eq.s32.totalorder %s20, 7
    %p131 = por %p129, %p130
    %p133 = scmp.ne.s32.totalorder %s116, %s132
    %p134 = scmp.eq.s32.totalorder %s20, 0
    %p135 = por %p133, %p134
    %s137 = sadd.s32 %s136, 1
    %p140 = scmp.eq.s32.totalorder %s14, 7
    %p141 = scmp.ne.s32.totalorder %s136, %s138
    %p142 = scmp.eq.s32.totalorder %s14, 0
    %p143 = por %p141, %p142
    %p144 = scmp.ne.s32.totalorder %s136, %s138
    %p145 = scmp.eq.s32.totalorder %s19, 7
    %p146 = por %p144, %p145
    %p147 = scmp.ne.s32.totalorder %s138, %s139
    %p148 = scmp.eq.s32.totalorder %s19, 0
    %p149 = por %p147, %p148
    %p150 = scmp.ne.s32.totalorder %s138, %s139
    %p151 = scmp.eq.s32.totalorder %s20, 7
    %p152 = por %p150, %p151
    %p154 = scmp.ne.s32.totalorder %s139, %s153
    %p155 = scmp.eq.s32.totalorder %s20, 0
    %p156 = por %p154, %p155
    %s158 = sadd.s32 %s157, 1
    %p161 = scmp.eq.s32.totalorder %s14, 7
    %p162 = scmp.ne.s32.totalorder %s157, %s159
    %p163 = scmp.eq.s32.totalorder %s14, 0
    %p164 = por %p162, %p163
    %p165 = scmp.ne.s32.totalorder %s157, %s159
    %p166 = scmp.eq.s32.totalorder %s19, 7
    %p167 = por %p165, %p166
    %p168 = scmp.ne.s32.totalorder %s159, %s160
    %p169 = scmp.eq.s32.totalorder %s19, 0
    %p170 = por %p168, %p169
    %p171 = scmp.ne.s32.totalorder %s159, %s160
    %p172 = scmp.eq.s32.totalorder %s20, 7
    %p173 = por %p171, %p172
    %p175 = scmp.ne.s32.totalorder %s160, %s174
    %p176 = scmp.eq.s32.totalorder %s20, 0
    %p177 = por %p175, %p176
    %s179 = sadd.s32 %s178, 1
    %p182 = scmp.eq.s32.totalorder %s14, 7
    %p183 = scmp.ne.s32.totalorder %s178, %s180
    %p184 = scmp.eq.s32.totalorder %s14, 0
    %p185 = por %p183, %p184
    %p186 = scmp.ne.s32.totalorder %s178, %s180
    %p187 = scmp.eq.s32.totalorder %s19, 7
    %p188 = por %p186, %p187
    %p189 = scmp.ne.s32.totalorder %s180, %s181
    %p190 = scmp.eq.s32.totalorder %s19, 0
    %p191 = por %p189, %p190
    %p192 = scmp.ne.s32.totalorder %s180, %s181
    %p193 = scmp.eq.s32.totalorder %s20, 7
    %p194 = por %p192, %p193
    %p196 = scmp.ne.s32.totalorder %s181, %s195
    %p197 = scmp.eq.s32.totalorder %s20, 0
    %p198 = por %p196, %p197
    %s199 = smul.u32 %s21, 4
    %s200 = sadd.s32 %s199, %s22
    %s201 = smul.u32 %s33, 4
    %s202 = sadd.s32 %s201, %s29
    %s203 = ssub.s32 %s200, %s202
    %p204 = scmp.eq.s32.totalorder %s203, 0
    %s206 = sadd.s32 %s205, 1
    %s207 = scalar_select %p204, %s205, %s206
    %p210 = pneg %p204
    %p211 = scmp.eq.s32.totalorder %s14, 7
    %p212 = por %p210, %p211
    %p213 = scmp.ne.s32.totalorder %s205, %s208
    %p214 = scmp.eq.s32.totalorder %s14, 0
    %p215 = por %p213, %p214
    %p216 = scmp.ne.s32.totalorder %s205, %s208
    %p217 = scmp.eq.s32.totalorder %s19, 7
    %p218 = por %p216, %p217
    %p219 = scmp.ne.s32.totalorder %s208, %s209
    %p220 = scmp.eq.s32.totalorder %s19, 0
    %p221 = por %p219, %p220
    %p222 = scmp.ne.s32.totalorder %s208, %s209
    %p223 = scmp.eq.s32.totalorder %s20, 7
    %p224 = por %p222, %p223
    %p226 = scmp.ne.s32.totalorder %s209, %s225
    %p227 = scmp.eq.s32.totalorder %s20, 0
    %p228 = por %p226, %p227
    %s229 = smul.u32 %s21, 4
    %s230 = sadd.s32 %s229, %s22
    %s231 = smul.u32 %s33, 4
    %s232 = sadd.s32 %s231, %s29
    %s233 = ssub.s32 %s230, %s232
    %p234 = scmp.eq.s32.totalorder %s233, 0
    %s236 = sadd.s32 %s235, 1
    %s237 = scalar_select %p234, %s235, %s236
    %p240 = pneg %p234
    %p241 = scmp.eq.s32.totalorder %s14, 7
    %p242 = por %p240, %p241
    %p243 = scmp.ne.s32.totalorder %s235, %s238
    %p244 = scmp.eq.s32.totalorder %s14, 0
    %p245 = por %p243, %p244
    %p246 = scmp.ne.s32.totalorder %s235, %s238
    %p247 = scmp.eq.s32.totalorder %s19, 7
    %p248 = por %p246, %p247
    %p249 = scmp.ne.s32.totalorder %s238, %s239
    %p250 = scmp.eq.s32.totalorder %s19, 0
    %p251 = por %p249, %p250
    %p252 = scmp.ne.s32.totalorder %s238, %s239
    %p253 = scmp.eq.s32.totalorder %s20, 7
    %p254 = por %p252, %p253
    %p256 = scmp.ne.s32.totalorder %s239, %s255
    %p257 = scmp.eq.s32.totalorder %s20, 0
    %p258 = por %p256, %p257
    %p259 = scmp.le.s32.totalorder 1, %s14
    %p260 = scmp.lt.s32.totalorder %s14, 9
    %p261 = pnand %p259, %p260
    %p262 = pneg %p261
    // Predicated region
    $region9: #{residual_block.4} parent=5 // pred_check
      _
    $region10: #{residual_block.4} parent=5 // pred_check_branch
      %264 = sbr.rel (%p261) target = $region12
    $region11: #{residual_block.4} parent=5 // pred_region
      %s265 = ssub.s32 %s14, 1
      // Predicated region
      $region13: #{residual_block.4} parent=11 // pred_check
        %p266 = pneg %p149
      $region14: #{residual_block.4} parent=11 // pred_check_branch
        %268 = sbr.rel (%p266) target = $region16
      $region15: #{residual_block.4} parent=11 // pred_region
        _
      $region16: #{residual_block.4} parent=11 // pred_fallthru
        _
      // Predicated region
      $region17: #{residual_block.4} parent=11 // pred_check
        %p269 = pneg %p170
      $region18: #{residual_block.4} parent=11 // pred_check_branch
        %271 = sbr.rel (%p269) target = $region20
      $region19: #{residual_block.4} parent=11 // pred_region
        _
      $region20: #{residual_block.4} parent=11 // pred_fallthru
        _
      // Predicated region
      $region21: #{residual_block.4} parent=11 // pred_check
        %p272 = pneg %p191
      $region22: #{residual_block.4} parent=11 // pred_check_branch
        %274 = sbr.rel (%p272) target = $region24
      $region23: #{residual_block.4} parent=11 // pred_region
        _
      $region24: #{residual_block.4} parent=11 // pred_fallthru
        _
    $region12: #{residual_block.4} parent=5 // pred_fallthru
      _
    %p275 = scmp.lt.s32.totalorder %s14, 8
    // Predicated region
    $region25: #{residual_block.4} parent=5 // pred_check
      %p276 = pneg %p275
    $region26: #{residual_block.4} parent=5 // pred_check_branch
      %278 = sbr.rel (%p276) target = $region28
    $region27: #{residual_block.4} parent=5 // pred_region
      // Predicated region
      $region29: #{residual_block.4} parent=27 // pred_check
        %p279 = pneg %p50
      $region30: #{residual_block.4} parent=27 // pred_check_branch
        %281 = sbr.rel (%p279) target = $region32
      $region31: #{residual_block.4} parent=27 // pred_region
        %s282 = smul.u32 %s21, 4
        %s283 = sadd.s32 %s282, %s22
        %p284 = scmp.lt.s32.totalorder %s283, 7
        %s285 = scalar_select %p284, %s283, 7
        %s286 = smul.addr %s285, 8
        %s287 = smul.addr %s286, 4
        %s288 = scalar_lea.vmem %s0, %s287
        %s289 = smul.u32 %s21, 4
        %s290 = sadd.s32 %s289, %s22
      $region32: #{residual_block.4} parent=27 // pred_fallthru
        _
      // Predicated region
      $region33: #{residual_block.4} parent=27 // pred_check
        %p291 = pneg %p86
      $region34: #{residual_block.4} parent=27 // pred_check_branch
        %293 = sbr.rel (%p291) target = $region36
      $region35: #{residual_block.4} parent=27 // pred_region
        %s294 = smul.u32 %s21, 4
        %s295 = ssub.s32 %s22, 1
        %p296 = scmp.gt.s32.totalorder %s295, 0
        %s297 = scalar_select %p296, %s295, 0
        %s298 = sadd.s32 %s294, %s297
        %p299 = scmp.lt.s32.totalorder %s298, 7
        %s300 = scalar_select %p299, %s298, 7
        %s301 = smul.addr %s300, 8
        %s302 = smul.addr %s301, 4
        %s303 = scalar_lea.vmem %s1, %s302
        %s304 = smul.u32 %s21, 4
        %s305 = ssub.s32 %s22, 1
        %p306 = scmp.gt.s32.totalorder %s305, 0
        %s307 = scalar_select %p306, %s305, 0
        %s308 = sadd.s32 %s304, %s307
      $region36: #{residual_block.4} parent=27 // pred_fallthru
        _
      // Predicated region
      $region37: #{residual_block.4} parent=27 // pred_check
        %p309 = pneg %p122
      $region38: #{residual_block.4} parent=27 // pred_check_branch
        %311 = sbr.rel (%p309) target = $region40
      $region39: #{residual_block.4} parent=27 // pred_region
        %s312 = smul.u32 %s21, 4
        %s313 = sadd.s32 %s22, 1
        %p314 = scmp.lt.s32.totalorder %s313, 3
        %s315 = scalar_select %p314, %s313, 3
        %s316 = sadd.s32 %s312, %s315
        %p317 = scmp.lt.s32.totalorder %s316, 7
        %s318 = scalar_select %p317, %s316, 7
        %s319 = smul.addr %s318, 8
        %s320 = smul.addr %s319, 4
        %s321 = scalar_lea.vmem %s2, %s320
        %s322 = smul.u32 %s21, 4
        %s323 = sadd.s32 %s22, 1
        %p324 = scmp.lt.s32.totalorder %s323, 3
        %s325 = scalar_select %p324, %s323, 3
        %s326 = sadd.s32 %s322, %s325
      $region40: #{residual_block.4} parent=27 // pred_fallthru
        _
    $region28: #{residual_block.4} parent=5 // pred_fallthru
      _
    %p327 = scmp.le.s32.totalorder 1, %s14
    %p328 = scmp.lt.s32.totalorder %s14, 9
    %p329 = pnand %p327, %p328
    %p330 = pneg %p329
    // Predicated region
    $region41: #{residual_block.4} parent=5 // pred_check
      _
    $region42: #{residual_block.4} parent=5 // pred_check_branch
      %332 = sbr.rel (%p329) target = $region44
    $region43: #{residual_block.4} parent=5 // pred_region
      %s333 = ssub.s32 %s14, 1
      %s334 = smul.u32 %s23, 4
      %s335 = sadd.s32 %s334, %s24
      %p336 = scmp.lt.s32.totalorder %s335, 7
      %s337 = scalar_select %p336, %s335, 7
      %s338 = smul.addr %s337, 8
      %s339 = smul.addr %s338, 4
      %s340 = scalar_lea.vmem %s0, %s339
      %p341 = pneg %p56
      %p342 = pneg %p53
      %s343 = smul.u32 %s23, 4
      %s344 = ssub.s32 %s24, 1
      %p345 = scmp.gt.s32.totalorder %s344, 0
      %s346 = scalar_select %p345, %s344, 0
      %s347 = sadd.s32 %s343, %s346
      %p348 = scmp.lt.s32.totalorder %s347, 7
      %s349 = scalar_select %p348, %s347, 7
      %s350 = smul.addr %s349, 8
      %s351 = smul.addr %s350, 4
      %s352 = scalar_lea.vmem %s1, %s351
      %p353 = pneg %p92
      %p354 = pneg %p89
      %s355 = smul.u32 %s23, 4
      %s356 = sadd.s32 %s24, 1
      %p357 = scmp.lt.s32.totalorder %s356, 3
      %s358 = scalar_select %p357, %s356, 3
      %s359 = sadd.s32 %s355, %s358
      %p360 = scmp.lt.s32.totalorder %s359, 7
      %s361 = scalar_select %p360, %s359, 7
      %s362 = smul.addr %s361, 8
      %s363 = smul.addr %s362, 4
      %s364 = scalar_lea.vmem %s2, %s363
      %p365 = pneg %p128
      %p366 = pneg %p125
      %p367 = pneg %p149
      %p368 = pneg %p146
      %p369 = pneg %p170
      %p370 = pneg %p167
      %p371 = pneg %p191
      %p372 = pneg %p188
      %p373 = pneg %p221
      %p374 = pneg %p218
      %s375 = smul.u32 %s23, 4
      %s376 = sadd.s32 %s375, %s24
      %p377 = scmp.lt.s32.totalorder %s376, 7
      %s378 = scalar_select %p377, %s376, 7
      %s379 = smul.addr %s378, 8
      %s380 = smul.addr %s379, 4
      %s381 = scalar_lea.vmem %s6, %s380
      %p382 = pneg %p251
      %p383 = pneg %p248
      %s384 = smul.u32 %s23, 4
      %s385 = sadd.s32 %s384, %s24
      %p386 = scmp.lt.s32.totalorder %s385, 7
      %s387 = scalar_select %p386, %s385, 7
      %s388 = smul.addr %s387, 2
      %s389 = scalar_lea.vmem %s7, %s388
      %s390 = smul.u32 %s23, 4
      %s391 = sadd.s32 %s390, %s24
      %p392 = scmp.lt.s32.totalorder %s391, 7
      %s393 = scalar_select %p392, %s391, 7
      %s394 = smul.addr %s393, 8
      %s395 = smul.addr %s394, 4
      %s396 = scalar_lea.vmem %s0, %s395
      %s397 = smul.u32 %s23, 4
      %s398 = sadd.s32 %s397, %s24
      %s399 = smul.u32 %s23, 4
      %s400 = ssub.s32 %s24, 1
      %p401 = scmp.gt.s32.totalorder %s400, 0
      %s402 = scalar_select %p401, %s400, 0
      %s403 = sadd.s32 %s399, %s402
      %p404 = scmp.lt.s32.totalorder %s403, 7
      %s405 = scalar_select %p404, %s403, 7
      %s406 = smul.addr %s405, 8
      %s407 = smul.addr %s406, 4
      %s408 = scalar_lea.vmem %s1, %s407
      %s409 = smul.u32 %s23, 4
      %s410 = ssub.s32 %s24, 1
      %p411 = scmp.gt.s32.totalorder %s410, 0
      %s412 = scalar_select %p411, %s410, 0
      %s413 = sadd.s32 %s409, %s412
      %s414 = smul.u32 %s23, 4
      %s415 = sadd.s32 %s24, 1
      %p416 = scmp.lt.s32.totalorder %s415, 3
      %s417 = scalar_select %p416, %s415, 3
      %s418 = sadd.s32 %s414, %s417
      %p419 = scmp.lt.s32.totalorder %s418, 7
      %s420 = scalar_select %p419, %s418, 7
      %s421 = smul.addr %s420, 8
      %s422 = smul.addr %s421, 4
      %s423 = scalar_lea.vmem %s2, %s422
      %s424 = smul.u32 %s23, 4
      %s425 = sadd.s32 %s24, 1
      %p426 = scmp.lt.s32.totalorder %s425, 3
      %s427 = scalar_select %p426, %s425, 3
      %s428 = sadd.s32 %s424, %s427
      %s429 = smul.u32 %s23, 4
      %s430 = sadd.s32 %s429, %s24
      %p431 = scmp.lt.s32.totalorder %s430, 7
      %s432 = scalar_select %p431, %s430, 7
      %s433 = smul.addr %s432, 8
      %s434 = smul.addr %s433, 4
      %s435 = scalar_lea.vmem %s6, %s434
      %s436 = smul.u32 %s23, 4
      %s437 = sadd.s32 %s436, %s24
      %s438 = smul.u32 %s23, 4
      %s439 = sadd.s32 %s438, %s24
      %p440 = scmp.lt.s32.totalorder %s439, 7
      %s441 = scalar_select %p440, %s439, 7
      %s442 = smul.addr %s441, 2
      %s443 = scalar_lea.vmem %s7, %s442
      %s444 = smul.u32 %s23, 4
      %s445 = sadd.s32 %s444, %s24
      %v447 = vld [vmem:[%s3] sm:$0x1]
      %v448 = vld [vmem:[%s4] sm:$0x1]
      %v449 = vld [vmem:[%s396] sm:$0xf]
      %v450 = vld [vmem:[%s396 + $0x4] sm:$0xf]
      %v451 = vld [vmem:[%s396 + $0x8] sm:$0xf]
      %v452 = vld [vmem:[%s396 + $0xc] sm:$0xf]
      %v453 = vld [vmem:[%s396 + $0x10] sm:$0xf]
      %v454 = vld [vmem:[%s396 + $0x14] sm:$0xf]
      %v455 = vld [vmem:[%s396 + $0x18] sm:$0xf]
      %v456 = vld [vmem:[%s396 + $0x1c] sm:$0xf]
      %v457 = vunpack.c.l.bf16 %v449
      %v458 = vunpack.c.l.bf16 %v450
      %v459 = vunpack.c.l.bf16 %v451
      %v460 = vunpack.c.l.bf16 %v452
      %v461 = vunpack.c.l.bf16 %v453
      %v462 = vunpack.c.l.bf16 %v454
      %v463 = vunpack.c.l.bf16 %v455
      %v464 = vunpack.c.l.bf16 %v456
      %v466 = vlaneseq
      %v467 = vshrl.u32 %v466, 7
      %v468 = vsub.s32 0, %v467
      %v469 = vrot.slane %v447, %v468
      %v471 = vmul.f32 %v457, %v469
      %v472 = vmul.f32 %v458, %v469
      %v473 = vmul.f32 %v459, %v469
      %v474 = vmul.f32 %v460, %v469
      %v475 = vmul.f32 %v461, %v469
      %v476 = vmul.f32 %v462, %v469
      %v477 = vmul.f32 %v463, %v469
      %v478 = vmul.f32 %v464, %v469
      %v480 = vlaneseq
      %v481 = vshrl.u32 %v480, 7
      %v482 = vsub.s32 0, %v481
      %v483 = vrot.slane %v448, %v482
      %v485 = vadd.f32 %v471, %v483
      %v486 = vadd.f32 %v472, %v483
      %v487 = vadd.f32 %v473, %v483
      %v488 = vadd.f32 %v474, %v483
      %v489 = vadd.f32 %v475, %v483
      %v490 = vadd.f32 %v476, %v483
      %v491 = vadd.f32 %v477, %v483
      %v492 = vadd.f32 %v478, %v483
      %v493 = vmax.f32 %v485, 0.0
      %v494 = vmax.f32 %v486, 0.0
      %v495 = vmax.f32 %v487, 0.0
      %v496 = vmax.f32 %v488, 0.0
      %v497 = vmax.f32 %v489, 0.0
      %v498 = vmax.f32 %v490, 0.0
      %v499 = vmax.f32 %v491, 0.0
      %v500 = vmax.f32 %v492, 0.0
      %p501 = scmp.gt.s32.totalorder %s24, 0
      %v502 = vld [vmem:[%s408 + $0x18] sm:$0xf]
      %v503 = vld [vmem:[%s408 + $0x1c] sm:$0xf]
      %v504 = vunpack.c.l.bf16 %v502
      %v505 = vunpack.c.l.bf16 %v503
      %v506 = vmul.f32 %v504, %v469
      %v507 = vmul.f32 %v505, %v469
      %v508 = vadd.f32 %v506, %v483
      %v509 = vadd.f32 %v507, %v483
      %v510 = vmax.f32 %v508, 0.0
      %v511 = vmax.f32 %v509, 0.0
      %s512 = scalar_select %p501, 1, 0
      %v513 = vstv %s512
      %vm514 = vcmp.eq.s32.totalorder %v513, 1
      %v515 = vsel %vm514, %v510, 0.0
      %v516 = vsel %vm514, %v511, 0.0
      %p517 = scmp.lt.s32.totalorder %s24, 3
      %v518 = vld [vmem:[%s423] sm:$0xf]
      %v519 = vld [vmem:[%s423 + $0x4] sm:$0xf]
      %v520 = vunpack.c.l.bf16 %v518
      %v521 = vunpack.c.l.bf16 %v519
      %v522 = vmul.f32 %v520, %v469
      %v523 = vmul.f32 %v521, %v469
      %v524 = vadd.f32 %v522, %v483
      %v525 = vadd.f32 %v523, %v483
      %v526 = vmax.f32 %v524, 0.0
      %v527 = vmax.f32 %v525, 0.0
      %s528 = scalar_select %p517, 1, 0
      %v529 = vstv %s528
      %vm530 = vcmp.eq.s32.totalorder %v529, 1
      %v531 = vsel %vm530, %v526, 0.0
      %v532 = vsel %vm530, %v527, 0.0
      %v533 = vpack.c.bf16 %v516, %v515
      %v534 = vpack.c.bf16 %v494, %v493
      %v535 = vpack.c.bf16 %v496, %v495
      %v536 = vpack.c.bf16 %v498, %v497
      %v537 = vpack.c.bf16 %v500, %v499
      %v538 = vpack.c.bf16 %v532, %v531
      %v540 = vshrl.u32 %v533, 16
      %v542 = vrot.slane %v540, 7
      %v543 = vshll.u32 %v533, 16
      %v545 = vor.u32 %v542, %v543
      %v547 = vshrl.u32 %v534, 16
      %v549 = vrot.slane %v547, 7
      %v550 = vshll.u32 %v534, 16
      %v552 = vor.u32 %v549, %v550
      %v554 = vshrl.u32 %v535, 16
      %v556 = vrot.slane %v554, 7
      %v557 = vshll.u32 %v535, 16
      %v559 = vor.u32 %v556, %v557
      %v561 = vshrl.u32 %v536, 16
      %v563 = vrot.slane %v561, 7
      %v564 = vshll.u32 %v536, 16
      %v566 = vor.u32 %v563, %v564
      %v568 = vshrl.u32 %v537, 16
      %v570 = vrot.slane %v568, 7
      %v571 = vshll.u32 %v537, 16
      %v573 = vor.u32 %v570, %v571
      %v575 = vshrl.u32 %v538, 16
      %v577 = vrot.slane %v575, 7
      %v578 = vshll.u32 %v538, 16
      %v580 = vor.u32 %v577, %v578
      %vm593 = vcmask 1040384
      %vm594 = vsmask.f32 256
      %vm595 = vmand %vm593, %vm594
      %v596 = vsel %vm595, 0, %v545
      %v597 = vsel %vm595, 0, %v552
      %v598 = vsel %vm595, 0, %v559
      %v599 = vsel %vm595, 0, %v566
      %v600 = vsel %vm595, 0, %v573
      %v601 = vsel %vm595, 0, %v580
      %v602 = vsel %vm595, %v542, 0
      %v603 = vsel %vm595, %v549, 0
      %v604 = vsel %vm595, %v556, 0
      %v605 = vsel %vm595, %v563, 0
      %v606 = vsel %vm595, %v570, 0
      %v607 = vsel %vm595, %v577, 0
      %vm608 = vsmask.f32 7424
      %v610 = vshrl.u32 %v596, 16
      %v612 = vshll.u32 %v596, 16
      %v614 = vrot.slane %v612, 1
      %v615 = vor.u32 %v610, %v614
      %v617 = vshll.u32 %v602, 16
      %v619 = vrot.slane %v617, 1
      %v620 = vsel %vm608, %v615, %v619
      %v622 = vshrl.u32 %v597, 16
      %v624 = vshll.u32 %v597, 16
      %v626 = vrot.slane %v624, 1
      %v627 = vor.u32 %v622, %v626
      %v629 = vshll.u32 %v603, 16
      %v631 = vrot.slane %v629, 1
      %v632 = vsel %vm608, %v627, %v631
      %v634 = vshrl.u32 %v598, 16
      %v636 = vshll.u32 %v598, 16
      %v638 = vrot.slane %v636, 1
      %v639 = vor.u32 %v634, %v638
      %v641 = vshll.u32 %v604, 16
      %v643 = vrot.slane %v641, 1
      %v644 = vsel %vm608, %v639, %v643
      %v646 = vshrl.u32 %v599, 16
      %v648 = vshll.u32 %v599, 16
      %v650 = vrot.slane %v648, 1
      %v651 = vor.u32 %v646, %v650
      %v653 = vshll.u32 %v605, 16
      %v655 = vrot.slane %v653, 1
      %v656 = vsel %vm608, %v651, %v655
      %657 = vrot.lane.b32.xlu0 %v620, 4
      %v658 = vpop.permute.xlu0 %657
      %659 = vrot.lane.b32.xlu0 %v632, 4
      %v660 = vpop.permute.xlu0 %659
      %661 = vrot.lane.b32.xlu0 %v644, 4
      %v662 = vpop.permute.xlu0 %661
      %663 = vrot.lane.b32.xlu0 %v656, 4
      %v664 = vpop.permute.xlu0 %663
      %vm673 = vcmask 1046528
      %v674 = vrot.slane %v596, 1
      %v675 = vrot.slane %v602, 1
      %v676 = vsel %vm673, %v674, %v675
      %v677 = vrot.slane %v597, 1
      %v678 = vrot.slane %v603, 1
      %v679 = vsel %vm673, %v677, %v678
      %v680 = vrot.slane %v598, 1
      %v681 = vrot.slane %v604, 1
      %v682 = vsel %vm673, %v680, %v681
      %v683 = vrot.slane %v599, 1
      %v684 = vrot.slane %v605, 1
      %v685 = vsel %vm673, %v683, %v684
      %686 = vrot.lane.b32.xlu0 %v676, 8
      %v687 = vpop.permute.xlu0 %686
      %688 = vrot.lane.b32.xlu0 %v679, 8
      %v689 = vpop.permute.xlu0 %688
      %690 = vrot.lane.b32.xlu0 %v682, 8
      %v691 = vpop.permute.xlu0 %690
      %692 = vrot.lane.b32.xlu0 %v685, 8
      %v693 = vpop.permute.xlu0 %692
      %695 = vrot.lane.b32.xlu0 %v597, 12
      %v696 = vpop.permute.xlu0 %695
      %697 = vrot.lane.b32.xlu0 %v598, 12
      %v698 = vpop.permute.xlu0 %697
      %699 = vrot.lane.b32.xlu0 %v599, 12
      %v700 = vpop.permute.xlu0 %699
      %701 = vrot.lane.b32.xlu0 %v600, 12
      %v702 = vpop.permute.xlu0 %701
      %v704 = vshrl.u32 %v600, 16
      %v706 = vshll.u32 %v600, 16
      %v708 = vrot.slane %v706, 1
      %v709 = vor.u32 %v704, %v708
      %v711 = vshll.u32 %v606, 16
      %v713 = vrot.slane %v711, 1
      %v714 = vsel %vm608, %v709, %v713
      %715 = vrot.lane.b32.xlu0 %v632, 16
      %v716 = vpop.permute.xlu0 %715
      %717 = vrot.lane.b32.xlu0 %v644, 16
      %v718 = vpop.permute.xlu0 %717
      %719 = vrot.lane.b32.xlu0 %v656, 16
      %v720 = vpop.permute.xlu0 %719
      %721 = vrot.lane.b32.xlu0 %v714, 16
      %v722 = vpop.permute.xlu0 %721
      %v724 = vrot.slane %v600, 1
      %v725 = vrot.slane %v606, 1
      %v726 = vsel %vm673, %v724, %v725
      %727 = vrot.lane.b32.xlu0 %v679, 20
      %v728 = vpop.permute.xlu0 %727
      %729 = vrot.lane.b32.xlu0 %v682, 20
      %v730 = vpop.permute.xlu0 %729
      %731 = vrot.lane.b32.xlu0 %v685, 20
      %v732 = vpop.permute.xlu0 %731
      %733 = vrot.lane.b32.xlu0 %v726, 20
      %v734 = vpop.permute.xlu0 %733
      %736 = vrot.lane.b32.xlu0 %v598, 24
      %v737 = vpop.permute.xlu0 %736
      %738 = vrot.lane.b32.xlu0 %v599, 24
      %v739 = vpop.permute.xlu0 %738
      %740 = vrot.lane.b32.xlu0 %v600, 24
      %v741 = vpop.permute.xlu0 %740
      %742 = vrot.lane.b32.xlu0 %v601, 24
      %v743 = vpop.permute.xlu0 %742
      %v745 = vshrl.u32 %v601, 16
      %v747 = vshll.u32 %v601, 16
      %v749 = vrot.slane %v747, 1
      %v750 = vor.u32 %v745, %v749
      %v752 = vshll.u32 %v607, 16
      %v754 = vrot.slane %v752, 1
      %v755 = vsel %vm608, %v750, %v754
      %756 = vrot.lane.b32.xlu0 %v644, 28
      %v757 = vpop.permute.xlu0 %756
      %758 = vrot.lane.b32.xlu0 %v656, 28
      %v759 = vpop.permute.xlu0 %758
      %760 = vrot.lane.b32.xlu0 %v714, 28
      %v761 = vpop.permute.xlu0 %760
      %762 = vrot.lane.b32.xlu0 %v755, 28
      %v763 = vpop.permute.xlu0 %762
      %v765 = vrot.slane %v601, 1
      %v766 = vrot.slane %v607, 1
      %v767 = vsel %vm673, %v765, %v766
      %768 = vrot.lane.b32.xlu0 %v682, 32
      %v769 = vpop.permute.xlu0 %768
      %770 = vrot.lane.b32.xlu0 %v685, 32
      %v771 = vpop.permute.xlu0 %770
      %772 = vrot.lane.b32.xlu0 %v726, 32
      %v773 = vpop.permute.xlu0 %772
      %774 = vrot.lane.b32.xlu0 %v767, 32
      %v775 = vpop.permute.xlu0 %774
      %vm776 = vcmask 31744
      %v778 = vsel %vm776, %v596, %v658
      %v780 = vsel %vm776, %v597, %v660
      %v782 = vsel %vm776, %v598, %v662
      %v784 = vsel %vm776, %v599, %v664
      %vm785 = vcmask 64512
      %v787 = vsel %vm785, %v778, %v687
      %v789 = vsel %vm785, %v780, %v689
      %v791 = vsel %vm785, %v782, %v691
      %v793 = vsel %vm785, %v784, %v693
      %vm794 = vcmask 97280
      %v796 = vsel %vm794, %v787, %v696
      %v798 = vsel %vm794, %v789, %v698
      %v800 = vsel %vm794, %v791, %v700
      %v802 = vsel %vm794, %v793, %v702
      %vm803 = vcmask 130048
      %v805 = vsel %vm803, %v796, %v716
      %v807 = vsel %vm803, %v798, %v718
      %v809 = vsel %vm803, %v800, %v720
      %v811 = vsel %vm803, %v802, %v722
      %vm812 = vcmask 162816
      %v814 = vsel %vm812, %v805, %v728
      %v816 = vsel %vm812, %v807, %v730
      %v818 = vsel %vm812, %v809, %v732
      %v820 = vsel %vm812, %v811, %v734
      %vm821 = vcmask 195584
      %v823 = vsel %vm821, %v814, %v737
      %v825 = vsel %vm821, %v816, %v739
      %v827 = vsel %vm821, %v818, %v741
      %v829 = vsel %vm821, %v820, %v743
      %vm830 = vcmask 228352
      %v832 = vsel %vm830, %v823, %v757
      %v834 = vsel %vm830, %v825, %v759
      %v836 = vsel %vm830, %v827, %v761
      %v838 = vsel %vm830, %v829, %v763
      %vm839 = vcmask 261120
      %v841 = vsel %vm839, %v832, %v769
      %v843 = vsel %vm839, %v834, %v771
      %v845 = vsel %vm839, %v836, %v773
      %v847 = vsel %vm839, %v838, %v775
      %v848 = vld [vmem:[%s5] sm:$0xf]
      %v849 = vld [vmem:[%s5 + $0x4] sm:$0xf]
      %v850 = vld [vmem:[%s5 + $0x8] sm:$0xf]
      %v851 = vld [vmem:[%s5 + $0xc] sm:$0xf]
      %v852 = vld [vmem:[%s5 + $0x10] sm:$0x3]
      %v858 = vunpack.c.l.b16 %v848
      %v859 = vunpack.c.l.b16 %v849
      %v860 = vunpack.c.l.b16 %v850
      %v861 = vunpack.c.l.b16 %v851
      %v862 = vunpack.c.l.b16 %v852
      %v863 = vpack.c.b16 %v859, %v858
      %v864 = vpack.c.b16 %v861, %v860
      %v865 = vpack.c.b16 %v862, %v862
      %vm868 = vcmask 293888
      %v869 = vsel %vm868, %v841, 0
      %v871 = vsel %vm868, %v843, 0
      %v873 = vsel %vm868, %v845, 0
      %v875 = vsel %vm868, %v847, 0
      %vm877 = vcmask 1041408
      %v879 = vsel %vm877, %v865, 0
      %881 = vmatprep.subr.bf16.mxu0 0
      %882 = vmatpush1.bf16.msra.mxu0 0
      %883 = vmatprep.subr.bf16.mxu0 0
      %884 = vmatpush1.bf16.msra.mxu0 0
      %885 = vmatprep.subr.bf16.mxu0 0
      %886 = vmatpush1.bf16.msra.mxu0 0
      %887 = vmatprep.subr.bf16.mxu0 0
      %888 = vmatpush1.bf16.msra.mxu0 0
      %889 = vmatprep.subr.bf16.mxu0 0
      %890 = vmatpush1.bf16.msra.mxu0 0
      %891 = vmatprep.subr.bf16.mxu0 0
      %892 = vmatpush1.bf16.msra.mxu0 %v879
      %893 = vmatprep.subr.bf16.mxu0 0
      %894 = vmatpush1.bf16.msra.mxu0 %v864
      %895 = vmatprep.subr.bf16.mxu0 0
      %896 = vmatpush1.bf16.msra.mxu0 %v863
      %897 = vmatprep.subr.bf16.mxu0 0
      %898 = vmatpush2.bf16.msra.mxu0 0
      %899 = vmatprep.subr.bf16.mxu0 0
      %900 = vmatpush2.bf16.msra.mxu0 0
      %901 = vmatprep.subr.bf16.mxu0 0
      %902 = vmatpush2.bf16.msra.mxu0 0
      %903 = vmatprep.subr.bf16.mxu0 0
      %904 = vmatpush2.bf16.msra.mxu0 0
      %905 = vmatprep.subr.bf16.mxu0 0
      %906 = vmatpush2.bf16.msra.mxu0 0
      %907 = vmatprep.subr.bf16.mxu0 0
      %908 = vmatpush2.bf16.msra.mxu0 0
      %909 = vmatprep.subr.bf16.mxu0 0
      %910 = vmatpush2.bf16.msra.mxu0 0
      %911 = vmatprep.subr.bf16.mxu0 0
      %912 = vmatpush2.bf16.msra.mxu0 0
      %913 = vmatprep.mubr.bf16.mxu0 0
      %914 = vmatmul.mubr.bf16.gmra.mxu0 %v869
      %v915 = vpop.f32.mrf.mxu0
      %v916 = vadd.f32 0.0, %v915
      %v917 = vpop.f32.mrf.mxu0
      %v918 = vpop.f32.mrf.mxu0
      %v919 = vadd.f32 0.0, %v918
      %v920 = vpop.f32.mrf.mxu0
      %921 = vmatprep.mubr.bf16.mxu0 0
      %922 = vmatmul.mubr.bf16.gmra.mxu0 %v871
      %v923 = vpop.f32.mrf.mxu0
      %v924 = vadd.f32 0.0, %v923
      %v925 = vpop.f32.mrf.mxu0
      %v926 = vpop.f32.mrf.mxu0
      %v927 = vadd.f32 0.0, %v926
      %v928 = vpop.f32.mrf.mxu0
      %929 = vmatprep.mubr.bf16.mxu0 0
      %930 = vmatmul.mubr.bf16.gmra.mxu0 %v873
      %v931 = vpop.f32.mrf.mxu0
      %v932 = vadd.f32 0.0, %v931
      %v933 = vpop.f32.mrf.mxu0
      %v934 = vpop.f32.mrf.mxu0
      %v935 = vadd.f32 0.0, %v934
      %v936 = vpop.f32.mrf.mxu0
      %937 = vmatprep.mubr.bf16.mxu0 0
      %938 = vmatmul.mubr.bf16.gmra.mxu0 %v875
      %v939 = vpop.f32.mrf.mxu0
      %v940 = vadd.f32 0.0, %v939
      %v941 = vpop.f32.mrf.mxu0
      %v942 = vpop.f32.mrf.mxu0
      %v943 = vadd.f32 0.0, %v942
      %v944 = vpop.f32.mrf.mxu0
      %945 = vdwg.mxu0
      %v946 = vsel %vm776, %v916, 0.0
      %v947 = vsel %vm776, %v919, 0.0
      %v948 = vadd.f32 %v946, %v947
      %v949 = vsel %vm776, %v924, 0.0
      %v950 = vadd.f32 %v948, %v949
      %v951 = vsel %vm776, %v927, 0.0
      %v952 = vadd.f32 %v950, %v951
      %v953 = vsel %vm776, %v932, 0.0
      %v954 = vadd.f32 %v952, %v953
      %v955 = vsel %vm776, %v935, 0.0
      %v956 = vadd.f32 %v954, %v955
      %v957 = vsel %vm776, %v940, 0.0
      %v958 = vadd.f32 %v956, %v957
      %v959 = vsel %vm776, %v943, 0.0
      %v960 = vadd.f32 %v958, %v959
      %v961 = vrot.slane %v960, 4
      %v962 = vadd.f32 %v960, %v961
      %v963 = vrot.slane %v962, 2
      %v964 = vadd.f32 %v962, %v963
      %v965 = vrot.slane %v964, 1
      %v966 = vadd.f32 %v964, %v965
      %v967 = vmul.f32 %v916, %v916
      %v968 = vmul.f32 %v919, %v919
      %v969 = vmul.f32 %v924, %v924
      %v970 = vmul.f32 %v927, %v927
      %v971 = vmul.f32 %v932, %v932
      %v972 = vmul.f32 %v935, %v935
      %v973 = vmul.f32 %v940, %v940
      %v974 = vmul.f32 %v943, %v943
      %v975 = vsel %vm776, %v967, 0.0
      %v976 = vsel %vm776, %v968, 0.0
      %v977 = vadd.f32 %v975, %v976
      %v978 = vsel %vm776, %v969, 0.0
      %v979 = vadd.f32 %v977, %v978
      %v980 = vsel %vm776, %v970, 0.0
      %v981 = vadd.f32 %v979, %v980
      %v982 = vsel %vm776, %v971, 0.0
      %v983 = vadd.f32 %v981, %v982
      %v984 = vsel %vm776, %v972, 0.0
      %v985 = vadd.f32 %v983, %v984
      %v986 = vsel %vm776, %v973, 0.0
      %v987 = vadd.f32 %v985, %v986
      %v988 = vsel %vm776, %v974, 0.0
      %v989 = vadd.f32 %v987, %v988
      %v990 = vrot.slane %v989, 4
      %v991 = vadd.f32 %v989, %v990
      %v992 = vrot.slane %v991, 2
      %v993 = vadd.f32 %v991, %v992
      %v994 = vrot.slane %v993, 1
      %v995 = vadd.f32 %v993, %v994
      %vm996 = vcmask 1040384
      %v997 = vsel %vm996, %v966, %v995
      %vm998 = vcmask 25600
      %999 = vst.msk [vmem:[%s443] sm:$0x3] %vm998, %v997
      %v1000 = vpack.c.bf16 %v919, %v916
      %v1001 = vpack.c.bf16 %v927, %v924
      %v1002 = vpack.c.bf16 %v935, %v932
      %v1003 = vpack.c.bf16 %v943, %v940
      %v1008 = vunpack.c.l.b16 %v1000
      %v1009 = vunpack.c.h.b16 %v1000
      %v1010 = vunpack.c.l.b16 %v1001
      %v1011 = vunpack.c.h.b16 %v1001
      %v1012 = vunpack.c.l.b16 %v1002
      %v1013 = vunpack.c.h.b16 %v1002
      %v1014 = vunpack.c.l.b16 %v1003
      %v1015 = vunpack.c.h.b16 %v1003
      %v1016 = vpack.c.b16 %v1008, %v1008
      %v1017 = vpack.c.b16 %v1009, %v1009
      %v1018 = vpack.c.b16 %v1010, %v1010
      %v1019 = vpack.c.b16 %v1011, %v1011
      %v1020 = vpack.c.b16 %v1012, %v1012
      %v1021 = vpack.c.b16 %v1013, %v1013
      %v1022 = vpack.c.b16 %v1014, %v1014
      %v1023 = vpack.c.b16 %v1015, %v1015
      %vm1032 = vcmask 27648
      %1033 = vst.msk [vmem:[%s435] sm:$0xf] %vm1032, %v1016
      %1034 = vst.msk [vmem:[%s435 + $0x4] sm:$0xf] %vm1032, %v1017
      %1035 = vst.msk [vmem:[%s435 + $0x8] sm:$0xf] %vm1032, %v1018
      %1036 = vst.msk [vmem:[%s435 + $0xc] sm:$0xf] %vm1032, %v1019
      %1037 = vst.msk [vmem:[%s435 + $0x10] sm:$0xf] %vm1032, %v1020
      %1038 = vst.msk [vmem:[%s435 + $0x14] sm:$0xf] %vm1032, %v1021
      %1039 = vst.msk [vmem:[%s435 + $0x18] sm:$0xf] %vm1032, %v1022
      %1040 = vst.msk [vmem:[%s435 + $0x1c] sm:$0xf] %vm1032, %v1023
      %s1041 = smul.u32 %s23, 4
      %s1042 = sadd.s32 %s1041, %s24
      %p1043 = scmp.lt.s32.totalorder %s1042, 7
      %s1044 = scalar_select %p1043, %s1042, 7
      %s1045 = smul.addr %s1044, 8
      %s1046 = smul.addr %s1045, 4
      %s1047 = scalar_lea.vmem %s6, %s1046
      %s1048 = smul.u32 %s23, 4
      %s1049 = sadd.s32 %s1048, %s24
      %p1050 = scmp.lt.s32.totalorder %s1049, 7
      %s1051 = scalar_select %p1050, %s1049, 7
      %s1052 = smul.addr %s1051, 2
      %s1053 = scalar_lea.vmem %s7, %s1052
      // Predicated region
      $region45: #{residual_block.4} parent=43 // pred_check
        %p1054 = pneg %p218
      $region46: #{residual_block.4} parent=43 // pred_check_branch
        %1056 = sbr.rel (%p1054) target = $region48
      $region47: #{residual_block.4} parent=43 // pred_region
        %s1057 = smul.u32 %s23, 4
        %s1058 = sadd.s32 %s1057, %s24
      $region48: #{residual_block.4} parent=43 // pred_fallthru
        _
      // Predicated region
      $region49: #{residual_block.4} parent=43 // pred_check
        %p1059 = pneg %p248
      $region50: #{residual_block.4} parent=43 // pred_check_branch
        %1061 = sbr.rel (%p1059) target = $region52
      $region51: #{residual_block.4} parent=43 // pred_region
        %s1062 = smul.u32 %s23, 4
        %s1063 = sadd.s32 %s1062, %s24
      $region52: #{residual_block.4} parent=43 // pred_fallthru
        _
    $region44: #{residual_block.4} parent=5 // pred_fallthru
      _
    %p1064 = scmp.le.s32.totalorder 2, %s14
    // Predicated region
    $region53: #{residual_block.4} parent=5 // pred_check
      %p1065 = pneg %p1064
    $region54: #{residual_block.4} parent=5 // pred_check_branch
      %1067 = sbr.rel (%p1065) target = $region56
    $region55: #{residual_block.4} parent=5 // pred_region
      %s1068 = ssub.s32 %s14, 2
      // Predicated region
      $region57: #{residual_block.4} parent=55 // pred_check
        %p1069 = pneg %p224
      $region58: #{residual_block.4} parent=55 // pred_check_branch
        %1071 = sbr.rel (%p1069) target = $region60
      $region59: #{residual_block.4} parent=55 // pred_region
        %s1072 = smul.u32 %s25, 4
        %s1073 = sadd.s32 %s1072, %s26
        %p1074 = scmp.lt.s32.totalorder %s1073, 7
        %s1075 = scalar_select %p1074, %s1073, 7
        %s1076 = smul.addr %s1075, 8
        %s1077 = smul.addr %s1076, 4
        %s1078 = scalar_lea.vmem %s6, %s1077
      $region60: #{residual_block.4} parent=55 // pred_fallthru
        _
      // Predicated region
      $region61: #{residual_block.4} parent=55 // pred_check
        %p1079 = pneg %p254
      $region62: #{residual_block.4} parent=55 // pred_check_branch
        %1081 = sbr.rel (%p1079) target = $region64
      $region63: #{residual_block.4} parent=55 // pred_region
        %s1082 = smul.u32 %s25, 4
        %s1083 = sadd.s32 %s1082, %s26
        %p1084 = scmp.lt.s32.totalorder %s1083, 7
        %s1085 = scalar_select %p1084, %s1083, 7
        %s1086 = smul.addr %s1085, 2
        %s1087 = scalar_lea.vmem %s7, %s1086
      $region64: #{residual_block.4} parent=55 // pred_fallthru
        _
    $region56: #{residual_block.4} parent=5 // pred_fallthru
      _
  $region6: #{residual_block.4} parent=0 // loop_footer
    %s18 = sadd.s32 1, %s14
  $region7: #{residual_block.4} parent=0 // loop_footer_branch
    %13 = sbr.rel target = $region3
  $region8: #{residual_block.4} parent=0 // loop_exit
    _

// kernel: tile.15
$region0: #{tile.15}
  %s0 = inlined_call_operand.vmem [shape: f32[32,4], index: 0, kind: input, shape index: {}]
  %s1 = inlined_call_operand.vmem [shape: f32[1,128], index: 1, kind: output, shape index: {}]
  $region1: #{tile.15} parent=0
    #allocation0 [shape = 'u8[4096]{0}', space=vmem, size = 0x1000, scoped, tag = 'scoped mem for output reshape']
    %v2 = vld [vmem:[%s0] sm:$0x1]
    %vm3 = vcmask 31744
    %4 = vst.msk [vmem:[#allocation0] sm:$0x1] %vm3, %v2
    %s5 = scalar_lea.vmem %s0, 31
    %v6 = vld [vmem:[%s5] sm:$0x1]
    %7 = vrot.lane.b32.xlu0 %v6, 124
    %v8 = vpop.permute.xlu0 %7
    %vm9 = vcmask 1048544
    %10 = vst.msk [vmem:[#allocation0] sm:$0x1] %vm9, %v8
    %s11 = scalar_lea.vmem %s0, 30
    %v12 = vld [vmem:[%s11] sm:$0x1]
    %13 = vrot.lane.b32.xlu0 %v12, 120
    %v14 = vpop.permute.xlu0 %13
    %vm15 = vcmask 1015744
    %16 = vst.msk [vmem:[#allocation0] sm:$0x1] %vm15, %v14
    %s17 = scalar_lea.vmem %s0, 29
    %v18 = vld [vmem:[%s17] sm:$0x1]
    %19 = vrot.lane.b32.xlu0 %v18, 116
    %v20 = vpop.permute.xlu0 %19
    %vm21 = vcmask 982944
    %22 = vst.msk [vmem:[#allocation0] sm:$0x1] %vm21, %v20
    %s23 = scalar_lea.vmem %s0, 28
    %v24 = vld [vmem:[%s23] sm:$0x1]
    %25 = vrot.lane.b32.xlu0 %v24, 112
    %v26 = vpop.permute.xlu0 %25
    %vm27 = vcmask 950144
    %28 = vst.msk [vmem:[#allocation0] sm:$0x1] %vm27, %v26
    %s29 = scalar_lea.vmem %s0, 27
    %v30 = vld [vmem:[%s29] sm:$0x1]
    %31 = vrot.lane.b32.xlu0 %v30, 108
    %v32 = vpop.permute.xlu0 %31
    %vm33 = vcmask 917344
    %34 = vst.msk [vmem:[#allocation0] sm:$0x1] %vm33, %v32
    %s35 = scalar_lea.vmem %s0, 26
    %v36 = vld [vmem:[%s35] sm:$0x1]
    %37 = vrot.lane.b32.xlu0 %v36, 104
    %v38 = vpop.permute.xlu0 %37
    %vm39 = vcmask 884544
    %40 = vst.msk [vmem:[#allocation0] sm:$0x1] %vm39, %v38
    %s41 = scalar_lea.vmem %s0, 25
    %v42 = vld [vmem:[%s41] sm:$0x1]
    %43 = vrot.lane.b32.xlu0 %v42, 100
    %v44 = vpop.permute.xlu0 %43
    %vm45 = vcmask 851744
    %46 = vst.msk [vmem:[#allocation0] sm:$0x1] %vm45, %v44
    %s47 = scalar_lea.vmem %s0, 24
    %v48 = vld [vmem:[%s47] sm:$0x1]
    %49 = vrot.lane.b32.xlu0 %v48, 96
    %v50 = vpop.permute.xlu0 %49
    %vm51 = vcmask 818944
    %52 = vst.msk [vmem:[#allocation0] sm:$0x1] %vm51, %v50
    %s53 = scalar_lea.vmem %s0, 23
    %v54 = vld [vmem:[%s53] sm:$0x1]
    %55 = vrot.lane.b32.xlu0 %v54, 92
    %v56 = vpop.permute.xlu0 %55
    %vm57 = vcmask 786144
    %58 = vst.msk [vmem:[#allocation0] sm:$0x1] %vm57, %v56
    %s59 = scalar_lea.vmem %s0, 22
    %v60 = vld [vmem:[%s59] sm:$0x1]
    %61 = vrot.lane.b32.xlu0 %v60, 88
    %v62 = vpop.permute.xlu0 %61
    %vm63 = vcmask 753344
    %64 = vst.msk [vmem:[#allocation0] sm:$0x1] %vm63, %v62
    %s65 = scalar_lea.vmem %s0, 21
    %v66 = vld [vmem:[%s65] sm:$0x1]
    %67 = vrot.lane.b32.xlu0 %v66, 84
    %v68 = vpop.permute.xlu0 %67
    %vm69 = vcmask 720544
    %70 = vst.msk [vmem:[#allocation0] sm:$0x1] %vm69, %v68
    %s71 = scalar_lea.vmem %s0, 20
    %v72 = vld [vmem:[%s71] sm:$0x1]
    %73 = vrot.lane.b32.xlu0 %v72, 80
    %v74 = vpop.permute.xlu0 %73
    %vm75 = vcmask 687744
    %76 = vst.msk [vmem:[#allocation0] sm:$0x1] %vm75, %v74
    %s77 = scalar_lea.vmem %s0, 19
    %v78 = vld [vmem:[%s77] sm:$0x1]
    %79 = vrot.lane.b32.xlu0 %v78, 76
    %v80 = vpop.permute.xlu0 %79
    %vm81 = vcmask 654944
    %82 = vst.msk [vmem:[#allocation0] sm:$0x1] %vm81, %v80
    %s83 = scalar_lea.vmem %s0, 18
    %v84 = vld [vmem:[%s83] sm:$0x1]
    %85 = vrot.lane.b32.xlu0 %v84, 72
    %v86 = vpop.permute.xlu0 %85
    %vm87 = vcmask 622144
    %88 = vst.msk [vmem:[#allocation0] sm:$0x1] %vm87, %v86
    %s89 = scalar_lea.vmem %s0, 17
    %v90 = vld [vmem:[%s89] sm:$0x1]
    %91 = vrot.lane.b32.xlu0 %v90, 68
    %v92 = vpop.permute.xlu0 %91
    %vm93 = vcmask 589344
    %94 = vst.msk [vmem:[#allocation0] sm:$0x1] %vm93, %v92
    %s95 = scalar_lea.vmem %s0, 16
    %v96 = vld [vmem:[%s95] sm:$0x1]
    %97 = vrot.lane.b32.xlu0 %v96, 64
    %v98 = vpop.permute.xlu0 %97
    %vm99 = vcmask 556544
    %100 = vst.msk [vmem:[#allocation0] sm:$0x1] %vm99, %v98
    %s101 = scalar_lea.vmem %s0, 15
    %v102 = vld [vmem:[%s101] sm:$0x1]
    %103 = vrot.lane.b32.xlu0 %v102, 60
    %v104 = vpop.permute.xlu0 %103
    %vm105 = vcmask 523744
    %106 = vst.msk [vmem:[#allocation0] sm:$0x1] %vm105, %v104
    %s107 = scalar_lea.vmem %s0, 14
    %v108 = vld [vmem:[%s107] sm:$0x1]
    %109 = vrot.lane.b32.xlu0 %v108, 56
    %v110 = vpop.permute.xlu0 %109
    %vm111 = vcmask 490944
    %112 = vst.msk [vmem:[#allocation0] sm:$0x1] %vm111, %v110
    %s113 = scalar_lea.vmem %s0, 13
    %v114 = vld [vmem:[%s113] sm:$0x1]
    %115 = vrot.lane.b32.xlu0 %v114, 52
    %v116 = vpop.permute.xlu0 %115
    %vm117 = vcmask 458144
    %118 = vst.msk [vmem:[#allocation0] sm:$0x1] %vm117, %v116
    %s119 = scalar_lea.vmem %s0, 12
    %v120 = vld [vmem:[%s119] sm:$0x1]
    %121 = vrot.lane.b32.xlu0 %v120, 48
    %v122 = vpop.permute.xlu0 %121
    %vm123 = vcmask 425344
    %124 = vst.msk [vmem:[#allocation0] sm:$0x1] %vm123, %v122
    %s125 = scalar_lea.vmem %s0, 11
    %v126 = vld [vmem:[%s125] sm:$0x1]
    %127 = vrot.lane.b32.xlu0 %v126, 44
    %v128 = vpop.permute.xlu0 %127
    %vm129 = vcmask 392544
    %130 = vst.msk [vmem:[#allocation0] sm:$0x1] %vm129, %v128
    %s131 = scalar_lea.vmem %s0, 10
    %v132 = vld [vmem:[%s131] sm:$0x1]
    %133 = vrot.lane.b32.xlu0 %v132, 40
    %v134 = vpop.permute.xlu0 %133
    %vm135 = vcmask 359744
    %136 = vst.msk [vmem:[#allocation0] sm:$0x1] %vm135, %v134
    %s137 = scalar_lea.vmem %s0, 9
    %v138 = vld [vmem:[%s137] sm:$0x1]
    %139 = vrot.lane.b32.xlu0 %v138, 36
    %v140 = vpop.permute.xlu0 %139
    %vm141 = vcmask 326944
    %142 = vst.msk [vmem:[#allocation0] sm:$0x1] %vm141, %v140
    %s143 = scalar_lea.vmem %s0, 8
    %v144 = vld [vmem:[%s143] sm:$0x1]
    %145 = vrot.lane.b32.xlu0 %v144, 32
    %v146 = vpop.permute.xlu0 %145
    %vm147 = vcmask 294144
    %148 = vst.msk [vmem:[#allocation0] sm:$0x1] %vm147, %v146
    %s149 = scalar_lea.vmem %s0, 7
    %v150 = vld [vmem:[%s149] sm:$0x1]
    %151 = vrot.lane.b32.xlu0 %v150, 28
    %v152 = vpop.permute.xlu0 %151
    %vm153 = vcmask 261344
    %154 = vst.msk [vmem:[#allocation0] sm:$0x1] %vm153, %v152
    %s155 = scalar_lea.vmem %s0, 6
    %v156 = vld [vmem:[%s155] sm:$0x1]
    %157 = vrot.lane.b32.xlu0 %v156, 24
    %v158 = vpop.permute.xlu0 %157
    %vm159 = vcmask 228544
    %160 = vst.msk [vmem:[#allocation0] sm:$0x1] %vm159, %v158
    %s161 = scalar_lea.vmem %s0, 5
    %v162 = vld [vmem:[%s161] sm:$0x1]
    %163 = vrot.lane.b32.xlu0 %v162, 20
    %v164 = vpop.permute.xlu0 %163
    %vm165 = vcmask 195744
    %166 = vst.msk [vmem:[#allocation0] sm:$0x1] %vm165, %v164
    %s167 = scalar_lea.vmem %s0, 4
    %v168 = vld [vmem:[%s167] sm:$0x1]
    %169 = vrot.lane.b32.xlu0 %v168, 16
    %v170 = vpop.permute.xlu0 %169
    %vm171 = vcmask 162944
    %172 = vst.msk [vmem:[#allocation0] sm:$0x1] %vm171, %v170
    %s173 = scalar_lea.vmem %s0, 3
    %v174 = vld [vmem:[%s173] sm:$0x1]
    %175 = vrot.lane.b32.xlu0 %v174, 12
    %v176 = vpop.permute.xlu0 %175
    %vm177 = vcmask 130144
    %178 = vst.msk [vmem:[#allocation0] sm:$0x1] %vm177, %v176
    %s179 = scalar_lea.vmem %s0, 2
    %v180 = vld [vmem:[%s179] sm:$0x1]
    %181 = vrot.lane.b32.xlu0 %v180, 8
    %v182 = vpop.permute.xlu0 %181
    %vm183 = vcmask 97344
    %184 = vst.msk [vmem:[#allocation0] sm:$0x1] %vm183, %v182
    %s185 = scalar_lea.vmem %s0, 1
    %v186 = vld [vmem:[%s185] sm:$0x1]
    %187 = vrot.lane.b32.xlu0 %v186, 4
    %v188 = vpop.permute.xlu0 %187
    %vm189 = vcmask 64544
    %190 = vst.msk [vmem:[#allocation0] sm:$0x1] %vm189, %v188
    %s192 = sshll.u32 1, 1
    %s193 = ssub.s32 %s192, 1
    %v195 = vld [vmem:[#allocation0] sm:%s193]
    %s196 = sshll.u32 1, 1
    %s197 = ssub.s32 %s196, 1
    %198 = vst [vmem:[%s1] sm:%s197] %v195

// kernel: residual_block.5
$region0: #{residual_block.5}
  #allocation0 [shape = 'u32[]', space=smem, size = 0x4, offset = 0x4, fixed_abs, tag = 'smem constant byte address 0x4 - core index']
  #allocation1 [shape = 'u32[144,128]{1,0:T(1,128)}', space=vmem, size = 0x12000, scoped, tag = 'internal scratch']
  %s0 = inlined_call_operand.vmem [shape: bf16[8,2,128], index: 0, kind: input, shape index: {}]
  %s1 = inlined_call_operand.vmem [shape: f32[8,2,128], index: 1, kind: input, shape index: {}]
  %s2 = inlined_call_operand.vmem [shape: f32[1,128], index: 2, kind: input, shape index: {}]
  %s3 = inlined_call_operand.vmem [shape: f32[1,128], index: 3, kind: input, shape index: {}]
  %s4 = inlined_call_operand.vmem [shape: f32[8,2,128], index: 4, kind: output, shape index: {}]
  %s5 = sld [smem:[#allocation0]]
  $region49: #{residual_block.5} parent=0
    _
  %s7 = ssub.s32 1, %s5
  %s8 = scalar_select 0, %s7, %s5
  loop: start=0, step=1, limit=10
  $region2: #{residual_block.5} parent=0 // loop_pre_header
    _
  $region3: #{residual_block.5} parent=0 // loop_header
    %s10 = sphi 0, %s14
    %p11 = scmp.ge.s32.totalorder %s10, 10
    %s20 = sphi 0, %s22
    %s23 = sphi 0, %s20
    %s24 = sphi 0, %s23
    %s40 = sphi 0, %s24
    %s46 = sphi 0, %s48
    %s49 = sphi 0, %s46
    %s50 = sphi 0, %s49
    %s66 = sphi 0, %s50
    %s70 = sphi 0, %s70
    %s72 = sphi 0, %s70
    %s73 = sphi 0, %s72
    %s87 = sphi 0, %s73
    %s91 = sphi 0, %s91
    %s93 = sphi 0, %s91
    %s94 = sphi 0, %s93
    %s108 = sphi 0, %s94
    %s114 = sphi 0, %s116
    %s117 = sphi 0, %s114
    %s118 = sphi 0, %s117
    %s134 = sphi 0, %s118
  $region4: #{residual_block.5} parent=0 // loop_header_branch
    %13 = sbr.rel (%p11) target = $region8
  $region5: #{residual_block.5} parent=0 // loop_body
    %s15 = ssub.s32 %s10, 1
    %s16 = ssub.s32 %s10, 2
    %s17 = sadd.s32 %s10, 1
    %s18 = ssub.s32 %s10, %s17
    %p19 = scmp.eq.s32.totalorder %s18, 0
    %s21 = sadd.s32 %s20, 1
    %s22 = scalar_select %p19, %s20, %s21
    %p25 = pneg %p19
    %p26 = scmp.eq.s32.totalorder %s10, 7
    %p27 = por %p25, %p26
    %p28 = scmp.ne.s32.totalorder %s20, %s23
    %p29 = scmp.eq.s32.totalorder %s10, 0
    %p30 = por %p28, %p29
    %p31 = scmp.ne.s32.totalorder %s20, %s23
    %p32 = scmp.eq.s32.totalorder %s15, 7
    %p33 = por %p31, %p32
    %p34 = scmp.ne.s32.totalorder %s23, %s24
    %p35 = scmp.eq.s32.totalorder %s15, 0
    %p36 = por %p34, %p35
    %p37 = scmp.ne.s32.totalorder %s23, %s24
    %p38 = scmp.eq.s32.totalorder %s16, 7
    %p39 = por %p37, %p38
    %p41 = scmp.ne.s32.totalorder %s24, %s40
    %p42 = scmp.eq.s32.totalorder %s16, 0
    %p43 = por %p41, %p42
    %s44 = ssub.s32 %s10, %s17
    %p45 = scmp.eq.s32.totalorder %s44, 0
    %s47 = sadd.s32 %s46, 1
    %s48 = scalar_select %p45, %s46, %s47
    %p51 = pneg %p45
    %p52 = scmp.eq.s32.totalorder %s10, 7
    %p53 = por %p51, %p52
    %p54 = scmp.ne.s32.totalorder %s46, %s49
    %p55 = scmp.eq.s32.totalorder %s10, 0
    %p56 = por %p54, %p55
    %p57 = scmp.ne.s32.totalorder %s46, %s49
    %p58 = scmp.eq.s32.totalorder %s15, 7
    %p59 = por %p57, %p58
    %p60 = scmp.ne.s32.totalorder %s49, %s50
    %p61 = scmp.eq.s32.totalorder %s15, 0
    %p62 = por %p60, %p61
    %p63 = scmp.ne.s32.totalorder %s49, %s50
    %p64 = scmp.eq.s32.totalorder %s16, 7
    %p65 = por %p63, %p64
    %p67 = scmp.ne.s32.totalorder %s50, %s66
    %p68 = scmp.eq.s32.totalorder %s16, 0
    %p69 = por %p67, %p68
    %s71 = sadd.s32 %s70, 1
    %p74 = scmp.eq.s32.totalorder %s10, 7
    %p75 = scmp.ne.s32.totalorder %s70, %s72
    %p76 = scmp.eq.s32.totalorder %s10, 0
    %p77 = por %p75, %p76
    %p78 = scmp.ne.s32.totalorder %s70, %s72
    %p79 = scmp.eq.s32.totalorder %s15, 7
    %p80 = por %p78, %p79
    %p81 = scmp.ne.s32.totalorder %s72, %s73
    %p82 = scmp.eq.s32.totalorder %s15, 0
    %p83 = por %p81, %p82
    %p84 = scmp.ne.s32.totalorder %s72, %s73
    %p85 = scmp.eq.s32.totalorder %s16, 7
    %p86 = por %p84, %p85
    %p88 = scmp.ne.s32.totalorder %s73, %s87
    %p89 = scmp.eq.s32.totalorder %s16, 0
    %p90 = por %p88, %p89
    %s92 = sadd.s32 %s91, 1
    %p95 = scmp.eq.s32.totalorder %s10, 7
    %p96 = scmp.ne.s32.totalorder %s91, %s93
    %p97 = scmp.eq.s32.totalorder %s10, 0
    %p98 = por %p96, %p97
    %p99 = scmp.ne.s32.totalorder %s91, %s93
    %p100 = scmp.eq.s32.totalorder %s15, 7
    %p101 = por %p99, %p100
    %p102 = scmp.ne.s32.totalorder %s93, %s94
    %p103 = scmp.eq.s32.totalorder %s15, 0
    %p104 = por %p102, %p103
    %p105 = scmp.ne.s32.totalorder %s93, %s94
    %p106 = scmp.eq.s32.totalorder %s16, 7
    %p107 = por %p105, %p106
    %p109 = scmp.ne.s32.totalorder %s94, %s108
    %p110 = scmp.eq.s32.totalorder %s16, 0
    %p111 = por %p109, %p110
    %s112 = ssub.s32 %s10, %s17
    %p113 = scmp.eq.s32.totalorder %s112, 0
    %s115 = sadd.s32 %s114, 1
    %s116 = scalar_select %p113, %s114, %s115
    %p119 = pneg %p113
    %p120 = scmp.eq.s32.totalorder %s10, 7
    %p121 = por %p119, %p120
    %p122 = scmp.ne.s32.totalorder %s114, %s117
    %p123 = scmp.eq.s32.totalorder %s10, 0
    %p124 = por %p122, %p123
    %p125 = scmp.ne.s32.totalorder %s114, %s117
    %p126 = scmp.eq.s32.totalorder %s15, 7
    %p127 = por %p125, %p126
    %p128 = scmp.ne.s32.totalorder %s117, %s118
    %p129 = scmp.eq.s32.totalorder %s15, 0
    %p130 = por %p128, %p129
    %p131 = scmp.ne.s32.totalorder %s117, %s118
    %p132 = scmp.eq.s32.totalorder %s16, 7
    %p133 = por %p131, %p132
    %p135 = scmp.ne.s32.totalorder %s118, %s134
    %p136 = scmp.eq.s32.totalorder %s16, 0
    %p137 = por %p135, %p136
    %p138 = scmp.le.s32.totalorder 1, %s10
    %p139 = scmp.lt.s32.totalorder %s10, 9
    %p140 = pnand %p138, %p139
    %p141 = pneg %p140
    // Predicated region
    $region9: #{residual_block.5} parent=5 // pred_check
      _
    $region10: #{residual_block.5} parent=5 // pred_check_branch
      %143 = sbr.rel (%p140) target = $region12
    $region11: #{residual_block.5} parent=5 // pred_region
      %s144 = ssub.s32 %s10, 1
      // Predicated region
      $region13: #{residual_block.5} parent=11 // pred_check
        %p145 = pneg %p83
      $region14: #{residual_block.5} parent=11 // pred_check_branch
        %147 = sbr.rel (%p145) target = $region16
      $region15: #{residual_block.5} parent=11 // pred_region
        _
      $region16: #{residual_block.5} parent=11 // pred_fallthru
        _
      // Predicated region
      $region17: #{residual_block.5} parent=11 // pred_check
        %p148 = pneg %p104
      $region18: #{residual_block.5} parent=11 // pred_check_branch
        %150 = sbr.rel (%p148) target = $region20
      $region19: #{residual_block.5} parent=11 // pred_region
        _
      $region20: #{residual_block.5} parent=11 // pred_fallthru
        _
    $region12: #{residual_block.5} parent=5 // pred_fallthru
      _
    %p151 = scmp.lt.s32.totalorder %s10, 8
    // Predicated region
    $region21: #{residual_block.5} parent=5 // pred_check
      %p152 = pneg %p151
    $region22: #{residual_block.5} parent=5 // pred_check_branch
      %154 = sbr.rel (%p152) target = $region24
    $region23: #{residual_block.5} parent=5 // pred_region
      // Predicated region
      $region25: #{residual_block.5} parent=23 // pred_check
        %p155 = pneg %p30
      $region26: #{residual_block.5} parent=23 // pred_check_branch
        %157 = sbr.rel (%p155) target = $region28
      $region27: #{residual_block.5} parent=23 // pred_region
        %p158 = scmp.lt.s32.totalorder %s10, 7
        %s159 = scalar_select %p158, %s10, 7
        %s160 = scalar_lea.vmem %s0, %s159
      $region28: #{residual_block.5} parent=23 // pred_fallthru
        _
      // Predicated region
      $region29: #{residual_block.5} parent=23 // pred_check
        %p161 = pneg %p56
      $region30: #{residual_block.5} parent=23 // pred_check_branch
        %163 = sbr.rel (%p161) target = $region32
      $region31: #{residual_block.5} parent=23 // pred_region
        %p164 = scmp.lt.s32.totalorder %s10, 7
        %s165 = scalar_select %p164, %s10, 7
        %s166 = smul.addr %s165, 2
        %s167 = scalar_lea.vmem %s1, %s166
      $region32: #{residual_block.5} parent=23 // pred_fallthru
        _
    $region24: #{residual_block.5} parent=5 // pred_fallthru
      _
    %p168 = scmp.le.s32.totalorder 1, %s10
    %p169 = scmp.lt.s32.totalorder %s10, 9
    %p170 = pnand %p168, %p169
    %p171 = pneg %p170
    // Predicated region
    $region33: #{residual_block.5} parent=5 // pred_check
      _
    $region34: #{residual_block.5} parent=5 // pred_check_branch
      %173 = sbr.rel (%p170) target = $region36
    $region35: #{residual_block.5} parent=5 // pred_region
      %s174 = ssub.s32 %s10, 1
      %p175 = scmp.lt.s32.totalorder %s15, 7
      %s176 = scalar_select %p175, %s15, 7
      %s177 = scalar_lea.vmem %s0, %s176
      %p178 = pneg %p36
      %p179 = pneg %p33
      %p180 = scmp.lt.s32.totalorder %s15, 7
      %s181 = scalar_select %p180, %s15, 7
      %s182 = smul.addr %s181, 2
      %s183 = scalar_lea.vmem %s1, %s182
      %p184 = pneg %p62
      %p185 = pneg %p59
      %p186 = pneg %p83
      %p187 = pneg %p80
      %p188 = pneg %p104
      %p189 = pneg %p101
      %p190 = pneg %p130
      %p191 = pneg %p127
      %p192 = scmp.lt.s32.totalorder %s15, 7
      %s193 = scalar_select %p192, %s15, 7
      %s194 = smul.addr %s193, 2
      %s195 = scalar_lea.vmem %s4, %s194
      %p196 = scmp.lt.s32.totalorder %s15, 7
      %s197 = scalar_select %p196, %s15, 7
      %s198 = scalar_lea.vmem %s0, %s197
      %p199 = scmp.lt.s32.totalorder %s15, 7
      %s200 = scalar_select %p199, %s15, 7
      %s201 = smul.addr %s200, 2
      %s202 = scalar_lea.vmem %s1, %s201
      %p203 = scmp.lt.s32.totalorder %s15, 7
      %s204 = scalar_select %p203, %s15, 7
      %s205 = smul.addr %s204, 2
      %s206 = scalar_lea.vmem %s4, %s205
      %v207 = vld [vmem:[%s198] sm:$0x1]
      %v208 = vunpack.c.l.bf16 %v207
      %v209 = vld [vmem:[%s2] sm:$0x1]
      %v211 = vlaneseq
      %v212 = vshrl.u32 %v211, 7
      %v213 = vsub.s32 0, %v212
      %v214 = vrot.slane %v209, %v213
      %v216 = vmul.f32 %v208, %v214
      %v217 = vld [vmem:[%s3] sm:$0x1]
      %v219 = vlaneseq
      %v220 = vshrl.u32 %v219, 7
      %v221 = vsub.s32 0, %v220
      %v222 = vrot.slane %v217, %v221
      %v224 = vadd.f32 %v216, %v222
      %v225 = vmax.f32 %v224, 0.0
      %v226 = vld [vmem:[%s202] sm:$0x3]
      %v227 = vadd.f32 %v226, %v225
      %v228 = vmax.f32 %v227, 0.0
      %229 = vst [vmem:[%s206] sm:$0x3] %v228
      %p230 = scmp.lt.s32.totalorder %s15, 7
      %s231 = scalar_select %p230, %s15, 7
      %s232 = smul.addr %s231, 2
      %s233 = scalar_lea.vmem %s4, %s232
      // Predicated region
      $region37: #{residual_block.5} parent=35 // pred_check
        %p234 = pneg %p127
      $region38: #{residual_block.5} parent=35 // pred_check_branch
        %236 = sbr.rel (%p234) target = $region40
      $region39: #{residual_block.5} parent=35 // pred_region
        _
      $region40: #{residual_block.5} parent=35 // pred_fallthru
        _
    $region36: #{residual_block.5} parent=5 // pred_fallthru
      _
    %p237 = scmp.le.s32.totalorder 2, %s10
    // Predicated region
    $region41: #{residual_block.5} parent=5 // pred_check
      %p238 = pneg %p237
    $region42: #{residual_block.5} parent=5 // pred_check_branch
      %240 = sbr.rel (%p238) target = $region44
    $region43: #{residual_block.5} parent=5 // pred_region
      %s241 = ssub.s32 %s10, 2
      // Predicated region
      $region45: #{residual_block.5} parent=43 // pred_check
        %p242 = pneg %p133
      $region46: #{residual_block.5} parent=43 // pred_check_branch
        %244 = sbr.rel (%p242) target = $region48
      $region47: #{residual_block.5} parent=43 // pred_region
        %p245 = scmp.lt.s32.totalorder %s16, 7
        %s246 = scalar_select %p245, %s16, 7
        %s247 = smul.addr %s246, 2
        %s248 = scalar_lea.vmem %s4, %s247
      $region48: #{residual_block.5} parent=43 // pred_fallthru
        _
    $region44: #{residual_block.5} parent=5 // pred_fallthru
      _
  $region6: #{residual_block.5} parent=0 // loop_footer
    %s14 = sadd.s32 1, %s10
  $region7: #{residual_block.5} parent=0 // loop_footer_branch
    %9 = sbr.rel target = $region3
  $region8: #{residual_block.5} parent=0 // loop_exit
    _

</llo_original>
